<compile_context>
chip_gen: v7x
topology: tpu7x:2x2x1
jax: 0.10.0
libtpu: 0.0.40
codegen_flags: <defaults>
</compile_context>

<pallas_src>
import math
from functools import partial

import jax
import jax.numpy as jnp
import numpy as np
from jax.experimental import pallas as pl
from jax.experimental.pallas import tpu as pltpu

# Small synthetic sizes consistent with the module's hyper-parameters:
#   td_sa_d_model = E, td_sa_nhead = NHEAD, td_sa_h = H, seq len = S, batch = B
S, B, E, NHEAD, H = 8, 2, 32, 4, 48
HEAD_DIM = E // NHEAD
EPS = 1e-5           # nn.LayerNorm default
NEG_BIG = -1e30      # finite masking sentinel (avoids inf-inf -> NaN)
# MXU matmul-input dtype.  bf16 is the right default on v6e/v7x (f32 inputs force
# multi-pass MXU emulation); elementwise math stays f32 either way.
MXU_DTYPE = jnp.bfloat16


def _sa_layer_kernel(x_ref, n_wins_ref, w_in_ref, w_out_ref, w1_ref, w2_ref,
                     vec_ref, out_ref, *, nhead):
    """Whole (S, B, E) problem in one invocation; all matmuls M-batched over B*S rows."""
    s_len, b_sz, d_model = x_ref.shape
    d_ff = w1_ref.shape[1]
    hd = d_model // nhead
    rows = b_sz * s_len
    scale = 1.0 / math.sqrt(hd)
    mxdt = w_in_ref.dtype                         # MXU input dtype (bf16 / f32)

    # ---- packed 1-D params: one (8, max_dim) VMEM slab, statically row-sliced ----
    b_in  = vec_ref[0:1, :3 * d_model]            # (1, 3E)
    b_out = vec_ref[1:2, :d_model]
    b1    = vec_ref[2:3, :d_ff]
    b2    = vec_ref[3:4, :d_model]
    g1    = vec_ref[4:5, :d_model]
    be1   = vec_ref[5:6, :d_model]
    g2    = vec_ref[6:7, :d_model]
    be2   = vec_ref[7:8, :d_model]

    # ---- fold the (S,B,E)->(B*S,E) reordering into the kernel (rows in (b,s) order) ----
    x2 = jnp.concatenate([x_ref[:, b, :] for b in range(b_sz)], axis=0)   # (B*S, E) f32

    # ---- fused QKV projection: one MXU dot over all B*S rows ----
    qkv = jnp.dot(x2.astype(mxdt), w_in_ref[...],
                  preferred_element_type=jnp.float32) + b_in              # (rows, 3E) f32
    qkv_m = qkv.astype(mxdt)

    # ---- key-padding bias from SMEM scalars: (B, S); 0 where key < n_wins, -1e30 else ----
    # NOTE: if n_wins[b] == 0 PyTorch yields NaN (softmax over an all -inf row); here the
    # finite sentinel cancels in the max-subtraction and that row degenerates to an
    # unmasked softmax.  NISQA never feeds n_wins == 0.
    key_pos = jax.lax.broadcasted_iota(jnp.int32, (1, s_len), 1)
    bias = jnp.concatenate(
        [jnp.where(key_pos < n_wins_ref[b], 0.0, NEG_BIG).astype(jnp.float32)
         for b in range(b_sz)], axis=0)                                    # (B, S)

    # ---- multi-head attention: all heads in one (nhead*B)-batched einsum pair ----
    def to_heads(off):
        # (rows, hd-slice) per head -> (nhead*B, S, hd), batch ordered (head, batch)
        return jnp.concatenate(
            [qkv_m[:, off + h * hd: off + (h + 1) * hd].reshape(b_sz, s_len, hd)
             for h in range(nhead)], axis=0)

    qh, kh, vh = to_heads(0), to_heads(d_model), to_heads(2 * d_model)

    sc = jnp.einsum('nqd,nkd->nqk', qh, kh,
                    preferred_element_type=jnp.float32)                    # (HB, S, S) f32
    sc = sc.reshape(nhead, b_sz, s_len, s_len) * scale + bias[None, :, None, :]
    m = jnp.max(sc, axis=-1, keepdims=True)
    p = jnp.exp(sc - m)
    p = p * pl.reciprocal(jnp.sum(p, axis=-1, keepdims=True), approx=True)  # EUP slot
    p = p.reshape(nhead * b_sz, s_len, s_len).astype(mxdt)
    oh = jnp.einsum('nqk,nkd->nqd', p, vh,
                    preferred_element_type=jnp.float32)                    # (HB, S, hd) f32

    # scatter head outputs into their hd-lane slice of (rows, E); single out-proj dot
    ctx = jnp.concatenate(
        [oh[h * b_sz:(h + 1) * b_sz].reshape(rows, hd) for h in range(nhead)], axis=1)
    attn = jnp.dot(ctx.astype(mxdt), w_out_ref[...],
                   preferred_element_type=jnp.float32) + b_out             # (rows, E)

    # ---- residual + LayerNorm1  (dropout1 = identity in eval) ----
    y = x2 + attn
    mu = jnp.mean(y, axis=-1, keepdims=True)
    var = jnp.mean((y - mu) ** 2, axis=-1, keepdims=True)
    y = (y - mu) * jax.lax.rsqrt(var + EPS) * g1 + be1

    # ---- feed-forward: linear1 -> relu -> linear2  (inner dropout = identity) ----
    h1 = jnp.maximum(
        jnp.dot(y.astype(mxdt), w1_ref[...], preferred_element_type=jnp.float32) + b1, 0.0)
    ffn = jnp.dot(h1.astype(mxdt), w2_ref[...], preferred_element_type=jnp.float32) + b2

    # ---- residual + LayerNorm2  (dropout2 = identity in eval) ----
    z = y + ffn
    mu = jnp.mean(z, axis=-1, keepdims=True)
    var = jnp.mean((z - mu) ** 2, axis=-1, keepdims=True)
    z = (z - mu) * jax.lax.rsqrt(var + EPS) * g2 + be2

    # ---- emit directly in (S, B, E): per-batch stores (no wrapper transpose) ----
    z3 = z.reshape(b_sz, s_len, d_model)
    for b in range(b_sz):
        out_ref[:, b, :] = z3[b]


def prepare_params(params):
    """One-time conversion of PyTorch-layout params into the kernel's packed layout."""
    (w_in, b_in, w_out, b_out, w1, b1, w2, b2, g1, be1, g2, be2) = params
    w_in_t  = jnp.asarray(w_in.T,  MXU_DTYPE)     # (E, 3E)
    w_out_t = jnp.asarray(w_out.T, MXU_DTYPE)     # (E, E)
    w1_t    = jnp.asarray(w1.T,    MXU_DTYPE)     # (E, H)
    w2_t    = jnp.asarray(w2.T,    MXU_DTYPE)     # (H, E)
    vec_dim = max(3 * E, E, H)
    pad = lambda a: jnp.pad(a.astype(jnp.float32), (0, vec_dim - a.shape[0]))
    vecs = jnp.stack([pad(b_in), pad(b_out), pad(b1), pad(b2),
                      pad(g1), pad(be1), pad(g2), pad(be2)])               # (8, 96) f32
    return (w_in_t, w_out_t, w1_t, w2_t, vecs)


@jax.jit
def self_attention_layer(src, n_wins, kparams):
    """src: (S, B, E) float32, n_wins: (B,) int.  Returns (src_out, n_wins)."""
    s_len, batch, d_model = src.shape
    w_in_t, w_out_t, w1_t, w2_t, vecs = kparams
    vm = pl.BlockSpec(memory_space=pltpu.MemorySpace.VMEM)
    sm = pl.BlockSpec(memory_space=pltpu.MemorySpace.SMEM)
    # Gridless single invocation: total live data < 100 KB, every operand is a
    # whole-array block (no per-step pipeline overhead, no double-buffering).
    out = pl.pallas_call(
        partial(_sa_layer_kernel, nhead=NHEAD),
        out_shape=jax.ShapeDtypeStruct((s_len, batch, d_model), jnp.float32),
        in_specs=[vm, sm, vm, vm, vm, vm, vm],
        out_specs=vm,
    )(src, n_wins.astype(jnp.int32), w_in_t, w_out_t, w1_t, w2_t, vecs)
    return out, n_wins


def init_params(key):
    """Deterministic synthetic parameters matching the module's __init__ shapes."""
    ks = jax.random.split(key, 8)
    w_in = jax.random.normal(ks[0], (3 * E, E), jnp.float32) * 0.1    # MHA in_proj_weight
    b_in = jax.random.normal(ks[1], (3 * E,), jnp.float32) * 0.1      # MHA in_proj_bias
    w_out = jax.random.normal(ks[2], (E, E), jnp.float32) * 0.1       # MHA out_proj.weight
    b_out = jax.random.normal(ks[3], (E,), jnp.float32) * 0.1
    w1 = jax.random.normal(ks[4], (H, E), jnp.float32) * 0.1          # linear1
    b1 = jax.random.normal(ks[5], (H,), jnp.float32) * 0.1
    w2 = jax.random.normal(ks[6], (E, H), jnp.float32) * 0.1          # linear2
    b2 = jax.random.normal(ks[7], (E,), jnp.float32) * 0.1
    g1, be1 = jnp.ones((E,), jnp.float32), jnp.zeros((E,), jnp.float32)    # norm1
    g2, be2 = jnp.ones((E,), jnp.float32), jnp.zeros((E,), jnp.float32)    # norm2
    return (w_in, b_in, w_out, b_out, w1, b1, w2, b2, g1, be1, g2, be2)


def reference(src, n_wins, params):
    """Pure-f32 JAX replica of the PyTorch forward (eval mode) for verification."""
    (w_in, b_in, w_out, b_out, w1, b1, w2, b2, g1, be1, g2, be2) = params
    s_len, batch, d_model = src.shape
    hd = d_model // NHEAD
    x = jnp.transpose(src, (1, 0, 2))
    qkv = jnp.einsum('bse,fe->bsf', x, w_in) + b_in
    q, k, v = jnp.split(qkv, 3, axis=-1)
    sp = lambda t: t.reshape(batch, s_len, NHEAD, hd).transpose(0, 2, 1, 3)
    qh, kh, vh = sp(q), sp(k), sp(v)
    sc = jnp.einsum('bhqd,bhkd->bhqk', qh, kh) / math.sqrt(hd)
    valid = jnp.arange(s_len)[None, None, None, :] < n_wins[:, None, None, None]
    sc = jnp.where(valid, sc, -jnp.inf)
    p = jax.nn.softmax(sc, axis=-1)
    o = jnp.einsum('bhqk,bhkd->bhqd', p, vh).transpose(0, 2, 1, 3).reshape(batch, s_len, d_model)
    src2 = jnp.einsum('bse,fe->bsf', o, w_out) + b_out

    def ln(t, g, be):
        mu = t.mean(-1, keepdims=True)
        var = ((t - mu) ** 2).mean(-1, keepdims=True)
        return (t - mu) / jnp.sqrt(var + EPS) * g + be

    y = ln(x + src2, g1, be1)
    h1 = jax.nn.relu(jnp.einsum('bse,he->bsh', y, w1) + b1)
    src2 = jnp.einsum('bsh,eh->bse', h1, w2) + b2
    z = ln(y + src2, g2, be2)
    return jnp.transpose(z, (1, 0, 2)), n_wins


if __name__ == "__main__":
    key = jax.random.PRNGKey(0)
    k_src, k_par = jax.random.split(key)
    src = jax.random.normal(k_src, (S, B, E), jnp.float32)          # (seq, batch, d_model)
    n_wins = jnp.array([S, 5], dtype=jnp.int32)                     # valid windows per batch
    params = init_params(k_par)
    kparams = prepare_params(params)                                # one-time packing

    out, _ = self_attention_layer(src, n_wins, kparams)
    out = jax.block_until_ready(out)

    ref, _ = reference(src, n_wins, params)
    # bf16 MXU inputs (f32 accumulate) plus the EUP approximate-reciprocal softmax
    # dominate the deviation from the pure-f32 PyTorch-parity reference; outputs are
    # LayerNormed O(1), so this tolerance still catches structural bugs (masking,
    # head split/merge, LayerNorm, residuals), which would show up as O(1) errors.
    tol = 5e-2 if MXU_DTYPE == jnp.bfloat16 else 5e-3
    np.testing.assert_allclose(np.asarray(out), np.asarray(ref), rtol=tol, atol=tol)
    print("KERNEL_OK")
</pallas_src>

<mosaic_0001>
module attributes {stable_mosaic.version = 11 : i64} {
  func.func @_sa_layer_kernel(%arg0: memref<8x2x32xf32, #tpu.memory_space<vmem>>, %arg1: memref<2xi32, #tpu.memory_space<smem>>, %arg2: memref<32x96xbf16, #tpu.memory_space<vmem>>, %arg3: memref<32x32xbf16, #tpu.memory_space<vmem>>, %arg4: memref<32x48xbf16, #tpu.memory_space<vmem>>, %arg5: memref<48x32xbf16, #tpu.memory_space<vmem>>, %arg6: memref<8x96xf32, #tpu.memory_space<vmem>>, %arg7: memref<8x2x32xf32, #tpu.memory_space<vmem>>) attributes {dimension_semantics = [], scalar_prefetch = 0 : i64, scratch_operands = 0 : i64, tpu.core_type = #tpu.core_type<tc>} {
    %c0 = arith.constant 0 : index
    %c0_0 = arith.constant 0 : index
    %0 = vector.load %arg6[%c0, %c0_0] : memref<8x96xf32, #tpu.memory_space<vmem>>, vector<1x96xf32>
    %c1 = arith.constant 1 : index
    %c0_1 = arith.constant 0 : index
    %1 = vector.load %arg6[%c1, %c0_1] : memref<8x96xf32, #tpu.memory_space<vmem>>, vector<1x32xf32>
    %c2 = arith.constant 2 : index
    %c0_2 = arith.constant 0 : index
    %2 = vector.load %arg6[%c2, %c0_2] : memref<8x96xf32, #tpu.memory_space<vmem>>, vector<1x48xf32>
    %c3 = arith.constant 3 : index
    %c0_3 = arith.constant 0 : index
    %3 = vector.load %arg6[%c3, %c0_3] : memref<8x96xf32, #tpu.memory_space<vmem>>, vector<1x32xf32>
    %c4 = arith.constant 4 : index
    %c0_4 = arith.constant 0 : index
    %4 = vector.load %arg6[%c4, %c0_4] : memref<8x96xf32, #tpu.memory_space<vmem>>, vector<1x32xf32>
    %c5 = arith.constant 5 : index
    %c0_5 = arith.constant 0 : index
    %5 = vector.load %arg6[%c5, %c0_5] : memref<8x96xf32, #tpu.memory_space<vmem>>, vector<1x32xf32>
    %c6 = arith.constant 6 : index
    %c0_6 = arith.constant 0 : index
    %6 = vector.load %arg6[%c6, %c0_6] : memref<8x96xf32, #tpu.memory_space<vmem>>, vector<1x32xf32>
    %c7 = arith.constant 7 : index
    %c0_7 = arith.constant 0 : index
    %7 = vector.load %arg6[%c7, %c0_7] : memref<8x96xf32, #tpu.memory_space<vmem>>, vector<1x32xf32>
    %c0_8 = arith.constant 0 : index
    %c0_9 = arith.constant 0 : index
    %c0_10 = arith.constant 0 : index
    %8 = vector.load %arg0[%c0_8, %c0_9, %c0_10] : memref<8x2x32xf32, #tpu.memory_space<vmem>>, vector<8x1x32xf32>
    %9 = vector.shape_cast %8 : vector<8x1x32xf32> to vector<8x32xf32>
    %c0_11 = arith.constant 0 : index
    %c1_12 = arith.constant 1 : index
    %c0_13 = arith.constant 0 : index
    %10 = vector.load %arg0[%c0_11, %c1_12, %c0_13] : memref<8x2x32xf32, #tpu.memory_space<vmem>>, vector<8x1x32xf32>
    %11 = vector.shape_cast %10 : vector<8x1x32xf32> to vector<8x32xf32>
    %12 = tpu.concatenate %9, %11 in 0 : vector<8x32xf32>, vector<8x32xf32> -> vector<16x32xf32>
    %13 = arith.truncf %12 : vector<16x32xf32> to vector<16x32xbf16>
    %c0_14 = arith.constant 0 : index
    %c0_15 = arith.constant 0 : index
    %14 = vector.load %arg2[%c0_14, %c0_15] : memref<32x96xbf16, #tpu.memory_space<vmem>>, vector<32x96xbf16>
    %cst = arith.constant dense<0.000000e+00> : vector<16x96xf32>
    %15 = tpu.matmul %13, %14, %cst {dimension_numbers = #tpu.dot_dimension_numbers<[1], [0], [0], [1], [0, 0, 1, 1], [], []>} : vector<16x32xbf16>, vector<32x96xbf16>, vector<16x96xf32> -> vector<16x96xf32>
    %16 = vector.broadcast %0 : vector<1x96xf32> to vector<16x96xf32>
    %17 = arith.addf %15, %16 : vector<16x96xf32>
    %18 = arith.truncf %17 : vector<16x96xf32> to vector<16x96xbf16>
    %19 = tpu.iota {dimensions = array<i32: 1>} : vector<1x8xi32>
    %c0_16 = arith.constant 0 : index
    %20 = memref.load %arg1[%c0_16] : memref<2xi32, #tpu.memory_space<smem>>
    %21 = vector.broadcast %20 : i32 to vector<1x8xi32>
    %22 = arith.cmpi slt, %19, %21 : vector<1x8xi32>
    %cst_17 = arith.constant 0.000000e+00 : f32
    %cst_18 = arith.constant -1.000000e+30 : f32
    %23 = vector.broadcast %cst_17 : f32 to vector<1x8xf32>
    %24 = vector.broadcast %cst_18 : f32 to vector<1x8xf32>
    %25 = arith.select %22, %23, %24 : vector<1x8xi1>, vector<1x8xf32>
    %c1_19 = arith.constant 1 : index
    %26 = memref.load %arg1[%c1_19] : memref<2xi32, #tpu.memory_space<smem>>
    %27 = vector.broadcast %26 : i32 to vector<1x8xi32>
    %28 = arith.cmpi slt, %19, %27 : vector<1x8xi32>
    %cst_20 = arith.constant 0.000000e+00 : f32
    %cst_21 = arith.constant -1.000000e+30 : f32
    %29 = vector.broadcast %cst_20 : f32 to vector<1x8xf32>
    %30 = vector.broadcast %cst_21 : f32 to vector<1x8xf32>
    %31 = arith.select %28, %29, %30 : vector<1x8xi1>, vector<1x8xf32>
    %32 = tpu.concatenate %25, %31 in 0 : vector<1x8xf32>, vector<1x8xf32> -> vector<2x8xf32>
    %33 = vector.extract_strided_slice %18 {offsets = [0, 0], sizes = [16, 8], strides = [1, 1]} : vector<16x96xbf16> to vector<16x8xbf16>
    %34 = vector.shape_cast %33 : vector<16x8xbf16> to vector<2x8x8xbf16>
    %35 = vector.extract_strided_slice %18 {offsets = [0, 8], sizes = [16, 8], strides = [1, 1]} : vector<16x96xbf16> to vector<16x8xbf16>
    %36 = vector.shape_cast %35 : vector<16x8xbf16> to vector<2x8x8xbf16>
    %37 = vector.extract_strided_slice %18 {offsets = [0, 16], sizes = [16, 8], strides = [1, 1]} : vector<16x96xbf16> to vector<16x8xbf16>
    %38 = vector.shape_cast %37 : vector<16x8xbf16> to vector<2x8x8xbf16>
    %39 = vector.extract_strided_slice %18 {offsets = [0, 24], sizes = [16, 8], strides = [1, 1]} : vector<16x96xbf16> to vector<16x8xbf16>
    %40 = vector.shape_cast %39 : vector<16x8xbf16> to vector<2x8x8xbf16>
    %41 = tpu.concatenate %34, %36, %38, %40 in 0 : vector<2x8x8xbf16>, vector<2x8x8xbf16>, vector<2x8x8xbf16>, vector<2x8x8xbf16> -> vector<8x8x8xbf16>
    %42 = vector.extract_strided_slice %18 {offsets = [0, 32], sizes = [16, 8], strides = [1, 1]} : vector<16x96xbf16> to vector<16x8xbf16>
    %43 = vector.shape_cast %42 : vector<16x8xbf16> to vector<2x8x8xbf16>
    %44 = vector.extract_strided_slice %18 {offsets = [0, 40], sizes = [16, 8], strides = [1, 1]} : vector<16x96xbf16> to vector<16x8xbf16>
    %45 = vector.shape_cast %44 : vector<16x8xbf16> to vector<2x8x8xbf16>
    %46 = vector.extract_strided_slice %18 {offsets = [0, 48], sizes = [16, 8], strides = [1, 1]} : vector<16x96xbf16> to vector<16x8xbf16>
    %47 = vector.shape_cast %46 : vector<16x8xbf16> to vector<2x8x8xbf16>
    %48 = vector.extract_strided_slice %18 {offsets = [0, 56], sizes = [16, 8], strides = [1, 1]} : vector<16x96xbf16> to vector<16x8xbf16>
    %49 = vector.shape_cast %48 : vector<16x8xbf16> to vector<2x8x8xbf16>
    %50 = tpu.concatenate %43, %45, %47, %49 in 0 : vector<2x8x8xbf16>, vector<2x8x8xbf16>, vector<2x8x8xbf16>, vector<2x8x8xbf16> -> vector<8x8x8xbf16>
    %51 = vector.extract_strided_slice %18 {offsets = [0, 64], sizes = [16, 8], strides = [1, 1]} : vector<16x96xbf16> to vector<16x8xbf16>
    %52 = vector.shape_cast %51 : vector<16x8xbf16> to vector<2x8x8xbf16>
    %53 = vector.extract_strided_slice %18 {offsets = [0, 72], sizes = [16, 8], strides = [1, 1]} : vector<16x96xbf16> to vector<16x8xbf16>
    %54 = vector.shape_cast %53 : vector<16x8xbf16> to vector<2x8x8xbf16>
    %55 = vector.extract_strided_slice %18 {offsets = [0, 80], sizes = [16, 8], strides = [1, 1]} : vector<16x96xbf16> to vector<16x8xbf16>
    %56 = vector.shape_cast %55 : vector<16x8xbf16> to vector<2x8x8xbf16>
    %57 = vector.extract_strided_slice %18 {offsets = [0, 88], sizes = [16, 8], strides = [1, 1]} : vector<16x96xbf16> to vector<16x8xbf16>
    %58 = vector.shape_cast %57 : vector<16x8xbf16> to vector<2x8x8xbf16>
    %59 = tpu.concatenate %52, %54, %56, %58 in 0 : vector<2x8x8xbf16>, vector<2x8x8xbf16>, vector<2x8x8xbf16>, vector<2x8x8xbf16> -> vector<8x8x8xbf16>
    "tpu.trace_start"() <{level = 10 : i32, message = "nqd,nkd->nqk"}> : () -> ()
    %cst_22 = arith.constant dense<0.000000e+00> : vector<8x8x8xf32>
    %60 = tpu.matmul %41, %50, %cst_22 {dimension_numbers = #tpu.dot_dimension_numbers<[2], [2], [1], [1], [0, 0, 0, 1, 1, 1], [0], [0]>} : vector<8x8x8xbf16>, vector<8x8x8xbf16>, vector<8x8x8xf32> -> vector<8x8x8xf32>
    "tpu.trace_stop"() : () -> ()
    %61 = vector.shape_cast %60 : vector<8x8x8xf32> to vector<4x2x8x8xf32>
    %cst_23 = arith.constant 0.353553385 : f32
    %62 = vector.broadcast %cst_23 : f32 to vector<4x2x8x8xf32>
    %63 = arith.mulf %61, %62 : vector<4x2x8x8xf32>
    %64 = vector.shape_cast %32 : vector<2x8xf32> to vector<1x2x1x8xf32>
    %65 = vector.broadcast %64 : vector<1x2x1x8xf32> to vector<4x2x8x8xf32>
    %66 = arith.addf %63, %65 : vector<4x2x8x8xf32>
    %cst_24 = arith.constant dense<0xFF800000> : vector<4x2x8xf32>
    %67 = vector.multi_reduction <maximumf>, %66, %cst_24 [3] : vector<4x2x8x8xf32> to vector<4x2x8xf32>
    %68 = vector.shape_cast %67 : vector<4x2x8xf32> to vector<4x2x8x1xf32>
    %69 = vector.broadcast %68 : vector<4x2x8x1xf32> to vector<4x2x8x8xf32>
    %70 = arith.subf %66, %69 : vector<4x2x8x8xf32>
    %71 = math.exp %70 : vector<4x2x8x8xf32>
    %cst_25 = arith.constant dense<0.000000e+00> : vector<4x2x8xf32>
    %72 = vector.multi_reduction <add>, %71, %cst_25 [3] : vector<4x2x8x8xf32> to vector<4x2x8xf32>
    %73 = vector.shape_cast %72 : vector<4x2x8xf32> to vector<4x2x8x1xf32>
    %74 = tpu.reciprocal %73 {approx = true} : vector<4x2x8x1xf32> -> vector<4x2x8x1xf32>
    %75 = vector.broadcast %74 : vector<4x2x8x1xf32> to vector<4x2x8x8xf32>
    %76 = arith.mulf %71, %75 : vector<4x2x8x8xf32>
    %77 = vector.shape_cast %76 : vector<4x2x8x8xf32> to vector<8x8x8xf32>
    %78 = arith.truncf %77 : vector<8x8x8xf32> to vector<8x8x8xbf16>
    "tpu.trace_start"() <{level = 10 : i32, message = "nqk,nkd->nqd"}> : () -> ()
    %cst_26 = arith.constant dense<0.000000e+00> : vector<8x8x8xf32>
    %79 = tpu.matmul %78, %59, %cst_26 {dimension_numbers = #tpu.dot_dimension_numbers<[2], [1], [1], [2], [0, 0, 0, 1, 1, 2], [0], [0]>} : vector<8x8x8xbf16>, vector<8x8x8xbf16>, vector<8x8x8xf32> -> vector<8x8x8xf32>
    "tpu.trace_stop"() : () -> ()
    %80 = vector.extract_strided_slice %79 {offsets = [0, 0, 0], sizes = [2, 8, 8], strides = [1, 1, 1]} : vector<8x8x8xf32> to vector<2x8x8xf32>
    %81 = vector.shape_cast %80 : vector<2x8x8xf32> to vector<16x8xf32>
    %82 = vector.extract_strided_slice %79 {offsets = [2, 0, 0], sizes = [2, 8, 8], strides = [1, 1, 1]} : vector<8x8x8xf32> to vector<2x8x8xf32>
    %83 = vector.shape_cast %82 : vector<2x8x8xf32> to vector<16x8xf32>
    %84 = vector.extract_strided_slice %79 {offsets = [4, 0, 0], sizes = [2, 8, 8], strides = [1, 1, 1]} : vector<8x8x8xf32> to vector<2x8x8xf32>
    %85 = vector.shape_cast %84 : vector<2x8x8xf32> to vector<16x8xf32>
    %86 = vector.extract_strided_slice %79 {offsets = [6, 0, 0], sizes = [2, 8, 8], strides = [1, 1, 1]} : vector<8x8x8xf32> to vector<2x8x8xf32>
    %87 = vector.shape_cast %86 : vector<2x8x8xf32> to vector<16x8xf32>
    %88 = tpu.concatenate %81, %83, %85, %87 in 1 : vector<16x8xf32>, vector<16x8xf32>, vector<16x8xf32>, vector<16x8xf32> -> vector<16x32xf32>
    %89 = arith.truncf %88 : vector<16x32xf32> to vector<16x32xbf16>
    %c0_27 = arith.constant 0 : index
    %c0_28 = arith.constant 0 : index
    %90 = vector.load %arg3[%c0_27, %c0_28] : memref<32x32xbf16, #tpu.memory_space<vmem>>, vector<32x32xbf16>
    %cst_29 = arith.constant dense<0.000000e+00> : vector<16x32xf32>
    %91 = tpu.matmul %89, %90, %cst_29 {dimension_numbers = #tpu.dot_dimension_numbers<[1], [0], [0], [1], [0, 0, 1, 1], [], []>} : vector<16x32xbf16>, vector<32x32xbf16>, vector<16x32xf32> -> vector<16x32xf32>
    %92 = vector.broadcast %1 : vector<1x32xf32> to vector<16x32xf32>
    %93 = arith.addf %91, %92 : vector<16x32xf32>
    %94 = arith.addf %12, %93 : vector<16x32xf32>
    %cst_30 = arith.constant dense<0.000000e+00> : vector<16xf32>
    %95 = vector.multi_reduction <add>, %94, %cst_30 [1] : vector<16x32xf32> to vector<16xf32>
    %96 = vector.shape_cast %95 : vector<16xf32> to vector<16x1xf32>
    %cst_31 = arith.constant 3.200000e+01 : f32
    %97 = vector.broadcast %cst_31 : f32 to vector<16x1xf32>
    %98 = arith.divf %96, %97 : vector<16x1xf32>
    %99 = vector.broadcast %98 : vector<16x1xf32> to vector<16x32xf32>
    %100 = arith.subf %94, %99 : vector<16x32xf32>
    %101 = arith.mulf %100, %100 : vector<16x32xf32>
    %cst_32 = arith.constant dense<0.000000e+00> : vector<16xf32>
    %102 = vector.multi_reduction <add>, %101, %cst_32 [1] : vector<16x32xf32> to vector<16xf32>
    %103 = vector.shape_cast %102 : vector<16xf32> to vector<16x1xf32>
    %cst_33 = arith.constant 3.200000e+01 : f32
    %104 = vector.broadcast %cst_33 : f32 to vector<16x1xf32>
    %105 = arith.divf %103, %104 : vector<16x1xf32>
    %106 = vector.broadcast %98 : vector<16x1xf32> to vector<16x32xf32>
    %107 = arith.subf %94, %106 : vector<16x32xf32>
    %cst_34 = arith.constant 9.99999974E-6 : f32
    %108 = vector.broadcast %cst_34 : f32 to vector<16x1xf32>
    %109 = arith.addf %105, %108 : vector<16x1xf32>
    %110 = math.rsqrt %109 : vector<16x1xf32>
    %111 = vector.broadcast %110 : vector<16x1xf32> to vector<16x32xf32>
    %112 = arith.mulf %107, %111 : vector<16x32xf32>
    %113 = vector.broadcast %4 : vector<1x32xf32> to vector<16x32xf32>
    %114 = arith.mulf %112, %113 : vector<16x32xf32>
    %115 = vector.broadcast %5 : vector<1x32xf32> to vector<16x32xf32>
    %116 = arith.addf %114, %115 : vector<16x32xf32>
    %117 = arith.truncf %116 : vector<16x32xf32> to vector<16x32xbf16>
    %c0_35 = arith.constant 0 : index
    %c0_36 = arith.constant 0 : index
    %118 = vector.load %arg4[%c0_35, %c0_36] : memref<32x48xbf16, #tpu.memory_space<vmem>>, vector<32x48xbf16>
    %cst_37 = arith.constant dense<0.000000e+00> : vector<16x48xf32>
    %119 = tpu.matmul %117, %118, %cst_37 {dimension_numbers = #tpu.dot_dimension_numbers<[1], [0], [0], [1], [0, 0, 1, 1], [], []>} : vector<16x32xbf16>, vector<32x48xbf16>, vector<16x48xf32> -> vector<16x48xf32>
    %120 = vector.broadcast %2 : vector<1x48xf32> to vector<16x48xf32>
    %121 = arith.addf %119, %120 : vector<16x48xf32>
    %cst_38 = arith.constant 0.000000e+00 : f32
    %122 = vector.broadcast %cst_38 : f32 to vector<16x48xf32>
    %123 = arith.maximumf %121, %122 : vector<16x48xf32>
    %124 = arith.truncf %123 : vector<16x48xf32> to vector<16x48xbf16>
    %c0_39 = arith.constant 0 : index
    %c0_40 = arith.constant 0 : index
    %125 = vector.load %arg5[%c0_39, %c0_40] : memref<48x32xbf16, #tpu.memory_space<vmem>>, vector<48x32xbf16>
    %cst_41 = arith.constant dense<0.000000e+00> : vector<16x32xf32>
    %126 = tpu.matmul %124, %125, %cst_41 {dimension_numbers = #tpu.dot_dimension_numbers<[1], [0], [0], [1], [0, 0, 1, 1], [], []>} : vector<16x48xbf16>, vector<48x32xbf16>, vector<16x32xf32> -> vector<16x32xf32>
    %127 = vector.broadcast %3 : vector<1x32xf32> to vector<16x32xf32>
    %128 = arith.addf %126, %127 : vector<16x32xf32>
    %129 = arith.addf %116, %128 : vector<16x32xf32>
    %cst_42 = arith.constant dense<0.000000e+00> : vector<16xf32>
    %130 = vector.multi_reduction <add>, %129, %cst_42 [1] : vector<16x32xf32> to vector<16xf32>
    %131 = vector.shape_cast %130 : vector<16xf32> to vector<16x1xf32>
    %cst_43 = arith.constant 3.200000e+01 : f32
    %132 = vector.broadcast %cst_43 : f32 to vector<16x1xf32>
    %133 = arith.divf %131, %132 : vector<16x1xf32>
    %134 = vector.broadcast %133 : vector<16x1xf32> to vector<16x32xf32>
    %135 = arith.subf %129, %134 : vector<16x32xf32>
    %136 = arith.mulf %135, %135 : vector<16x32xf32>
    %cst_44 = arith.constant dense<0.000000e+00> : vector<16xf32>
    %137 = vector.multi_reduction <add>, %136, %cst_44 [1] : vector<16x32xf32> to vector<16xf32>
    %138 = vector.shape_cast %137 : vector<16xf32> to vector<16x1xf32>
    %cst_45 = arith.constant 3.200000e+01 : f32
    %139 = vector.broadcast %cst_45 : f32 to vector<16x1xf32>
    %140 = arith.divf %138, %139 : vector<16x1xf32>
    %141 = vector.broadcast %133 : vector<16x1xf32> to vector<16x32xf32>
    %142 = arith.subf %129, %141 : vector<16x32xf32>
    %cst_46 = arith.constant 9.99999974E-6 : f32
    %143 = vector.broadcast %cst_46 : f32 to vector<16x1xf32>
    %144 = arith.addf %140, %143 : vector<16x1xf32>
    %145 = math.rsqrt %144 : vector<16x1xf32>
    %146 = vector.broadcast %145 : vector<16x1xf32> to vector<16x32xf32>
    %147 = arith.mulf %142, %146 : vector<16x32xf32>
    %148 = vector.broadcast %6 : vector<1x32xf32> to vector<16x32xf32>
    %149 = arith.mulf %147, %148 : vector<16x32xf32>
    %150 = vector.broadcast %7 : vector<1x32xf32> to vector<16x32xf32>
    %151 = arith.addf %149, %150 : vector<16x32xf32>
    %152 = vector.shape_cast %151 : vector<16x32xf32> to vector<2x8x32xf32>
    %153 = vector.extract_strided_slice %152 {offsets = [0, 0, 0], sizes = [1, 8, 32], strides = [1, 1, 1]} : vector<2x8x32xf32> to vector<1x8x32xf32>
    %154 = vector.shape_cast %153 : vector<1x8x32xf32> to vector<8x32xf32>
    %c0_47 = arith.constant 0 : index
    %c0_48 = arith.constant 0 : index
    %c0_49 = arith.constant 0 : index
    %155 = vector.load %arg7[%c0_47, %c0_48, %c0_49] : memref<8x2x32xf32, #tpu.memory_space<vmem>>, vector<8x1x32xf32>
    %156 = vector.shape_cast %155 : vector<8x1x32xf32> to vector<8x32xf32>
    %157 = vector.shape_cast %154 : vector<8x32xf32> to vector<8x1x32xf32>
    tpu.vector_store %arg7[%c0_47, %c0_48, %c0_49], %157 {strides = array<i32>} : memref<8x2x32xf32, #tpu.memory_space<vmem>>, vector<8x1x32xf32>,
    %158 = vector.extract_strided_slice %152 {offsets = [1, 0, 0], sizes = [1, 8, 32], strides = [1, 1, 1]} : vector<2x8x32xf32> to vector<1x8x32xf32>
    %159 = vector.shape_cast %158 : vector<1x8x32xf32> to vector<8x32xf32>
    %c0_50 = arith.constant 0 : index
    %c1_51 = arith.constant 1 : index
    %c0_52 = arith.constant 0 : index
    %160 = vector.load %arg7[%c0_50, %c1_51, %c0_52] : memref<8x2x32xf32, #tpu.memory_space<vmem>>, vector<8x1x32xf32>
    %161 = vector.shape_cast %160 : vector<8x1x32xf32> to vector<8x32xf32>
    %162 = vector.shape_cast %159 : vector<8x32xf32> to vector<8x1x32xf32>
    tpu.vector_store %arg7[%c0_50, %c1_51, %c0_52], %162 {strides = array<i32>} : memref<8x2x32xf32, #tpu.memory_space<vmem>>, vector<8x1x32xf32>,
    return
  }
}

</mosaic_0001>

<llo_original>
// kernel: self_attention_layer.1
$region0: #{self_attention_layer.1}
  #allocation0 [shape = 'u32[]', space=smem, size = 0x4, offset = 0x4, fixed_abs, tag = 'smem constant byte address 0x4 - core index']
  #allocation1 [shape = 'u32[144,128]{1,0:T(1,128)}', space=vmem, size = 0x12000, scoped, tag = 'internal scratch']
  %s0 = inlined_call_operand.vmem [shape: f32[8,2,32], index: 0, kind: input, shape index: {}]
  %s1 = inlined_call_operand.vmem [shape: s32[2], index: 1, kind: input, shape index: {}]
  %s2 = inlined_call_operand.vmem [shape: bf16[32,96], index: 2, kind: input, shape index: {}]
  %s3 = inlined_call_operand.vmem [shape: bf16[32,32], index: 3, kind: input, shape index: {}]
  %s4 = inlined_call_operand.hbm [shape: bf16[32,48], index: 4, kind: input, shape index: {}]
  %s5 = inlined_call_operand.vmem [shape: bf16[48,32], index: 5, kind: input, shape index: {}]
  %s6 = inlined_call_operand.hbm [shape: f32[8,96], index: 6, kind: input, shape index: {}]
  %s7 = inlined_call_operand.hbm [shape: f32[8,2,32], index: 7, kind: output, shape index: {}]
  %s8 = sld [smem:[#allocation0]]
  $region50: #{self_attention_layer.1} parent=0
    _
  %s10 = ssub.s32 1, %s8
  %s11 = scalar_select 0, %s10, %s8
  $region1: #{self_attention_layer.1} parent=0
    #allocation2 [shape = 'u8[512]{0}', space=smem, size = 0x200, scoped, tag = 'input window, operand 1, single buffered']
    #allocation3 [shape = 's32[1]{0}', space=sflag, size = 0x4, scoped, tag = 'scoped memory for self_attention_layer.1']
    #allocation4 [shape = 's32[1]{0}', space=sflag, size = 0x4, scoped, tag = 'scoped memory for self_attention_layer.1']
    #allocation5 [shape = 's32[1]{0}', space=sflag, size = 0x4, scoped, tag = 'scoped memory for self_attention_layer.1']
    #allocation6 [shape = 'u8[8192]{0}', space=vmem, size = 0x2000, scoped, tag = 'input window, operand 4, single buffered']
    #allocation7 [shape = 'u8[4096]{0}', space=vmem, size = 0x1000, scoped, tag = 'input window, operand 6, single buffered']
    #allocation8 [shape = 's32[1]{0}', space=sflag, size = 0x4, scoped, tag = 'scoped memory for self_attention_layer.1']
    #allocation9 [shape = 'u8[8192]{0}', space=vmem, size = 0x2000, scoped, tag = 'output window, operand 0, single buffered']
    %12 = vsyncpa [#allocation5], 0
    %13 = vsyncpa [#allocation3], 0
    %14 = vsyncpa [#allocation8], 0
    %15 = vsyncpa [#allocation4], 0
    // Predicated region
    $region2: #{self_attention_layer.1} parent=1 // pred_check
      _
    $region3: #{self_attention_layer.1} parent=1 // pred_check_branch
      %17 = sbr.rel (0) target = $region5
    $region4: #{self_attention_layer.1} parent=1 // pred_region
      _
    $region5: #{self_attention_layer.1} parent=1 // pred_fallthru
      _
    // Predicated region
    $region6: #{self_attention_layer.1} parent=1 // pred_check
      _
    $region7: #{self_attention_layer.1} parent=1 // pred_check_branch
      %19 = sbr.rel (0) target = $region9
    $region8: #{self_attention_layer.1} parent=1 // pred_region
      %s21 = ssub.s32 16, 16
      %22 = vsyncadd [#allocation5], %s21
      %s24 = sshll.u32 %s1, 4
      %s25 = int_to_ptr.vmem [resolvable:$true] %s24
      %27 = dma.vmem_to_smem %s25, 16, [#allocation2], [#allocation5]
    $region9: #{self_attention_layer.1} parent=1 // pred_fallthru
      _
    // Predicated region
    $region10: #{self_attention_layer.1} parent=1 // pred_check
      _
    $region11: #{self_attention_layer.1} parent=1 // pred_check_branch
      %29 = sbr.rel (0) target = $region13
    $region12: #{self_attention_layer.1} parent=1 // pred_region
      _
    $region13: #{self_attention_layer.1} parent=1 // pred_fallthru
      _
    // Predicated region
    $region14: #{self_attention_layer.1} parent=1 // pred_check
      _
    $region15: #{self_attention_layer.1} parent=1 // pred_check_branch
      %31 = sbr.rel (0) target = $region17
    $region16: #{self_attention_layer.1} parent=1 // pred_region
      _
    $region17: #{self_attention_layer.1} parent=1 // pred_fallthru
      _
    // Predicated region
    $region18: #{self_attention_layer.1} parent=1 // pred_check
      _
    $region19: #{self_attention_layer.1} parent=1 // pred_check_branch
      %33 = sbr.rel (0) target = $region21
    $region20: #{self_attention_layer.1} parent=1 // pred_region
      %s35 = ssub.s32 256, 256
      %36 = vsyncadd [#allocation3], %s35
      %s37 = sshll.u32 [#allocation6], 4
      %s38 = int_to_ptr.vmem [resolvable:$true] %s37
      %43 = dma.hbm_to_vmem [thread:$0]  %s4, 256, %s38, [#allocation3], 64, 64, 4
    $region21: #{self_attention_layer.1} parent=1 // pred_fallthru
      _
    // Predicated region
    $region22: #{self_attention_layer.1} parent=1 // pred_check
      _
    $region23: #{self_attention_layer.1} parent=1 // pred_check_branch
      %45 = sbr.rel (0) target = $region25
    $region24: #{self_attention_layer.1} parent=1 // pred_region
      _
    $region25: #{self_attention_layer.1} parent=1 // pred_fallthru
      _
    // Predicated region
    $region26: #{self_attention_layer.1} parent=1 // pred_check
      _
    $region27: #{self_attention_layer.1} parent=1 // pred_check_branch
      %47 = sbr.rel (0) target = $region29
    $region28: #{self_attention_layer.1} parent=1 // pred_region
      %s49 = ssub.s32 128, 128
      %50 = vsyncadd [#allocation8], %s49
      %s52 = sshll.u32 [#allocation7], 4
      %s53 = int_to_ptr.vmem [resolvable:$true] %s52
      %55 = dma.hbm_to_vmem [thread:$0]  %s6, 128, %s53, [#allocation8]
    $region29: #{self_attention_layer.1} parent=1 // pred_fallthru
      _
    // Predicated region
    $region30: #{self_attention_layer.1} parent=1 // pred_check
      _
    $region31: #{self_attention_layer.1} parent=1 // pred_check_branch
      %57 = sbr.rel (0) target = $region33
    $region32: #{self_attention_layer.1} parent=1 // pred_region
      %58 = dma.done [#allocation5], 16
    $region33: #{self_attention_layer.1} parent=1 // pred_fallthru
      _
    // Predicated region
    $region34: #{self_attention_layer.1} parent=1 // pred_check
      _
    $region35: #{self_attention_layer.1} parent=1 // pred_check_branch
      %60 = sbr.rel (0) target = $region37
    $region36: #{self_attention_layer.1} parent=1 // pred_region
      %61 = dma.done [#allocation3], 256
    $region37: #{self_attention_layer.1} parent=1 // pred_fallthru
      _
    // Predicated region
    $region38: #{self_attention_layer.1} parent=1 // pred_check
      _
    $region39: #{self_attention_layer.1} parent=1 // pred_check_branch
      %63 = sbr.rel (0) target = $region41
    $region40: #{self_attention_layer.1} parent=1 // pred_region
      %64 = dma.done [#allocation8], 128
    $region41: #{self_attention_layer.1} parent=1 // pred_fallthru
      _
    %65 = sfence
    %v67 = vld [vmem:[#allocation7] sm:$0x1]
    %v68 = vld [vmem:[#allocation7 + $0x1] sm:$0x1]
    %v69 = vld [vmem:[#allocation7 + $0x2] sm:$0x1]
    %v70 = vld [vmem:[#allocation7 + $0x3] sm:$0x1]
    %v71 = vld [vmem:[#allocation7 + $0x4] sm:$0x1]
    %v72 = vld [vmem:[#allocation7 + $0x5] sm:$0x1]
    %v73 = vld [vmem:[#allocation7 + $0x6] sm:$0x1]
    %v74 = vld [vmem:[#allocation7 + $0x7] sm:$0x1]
    %v75 = vld [vmem:[%s0] sm:$0x1]
    %v76 = vld [vmem:[%s0 + $0x2] sm:$0x1]
    %v77 = vld [vmem:[%s0 + $0x4] sm:$0x1]
    %v78 = vld [vmem:[%s0 + $0x6] sm:$0x1]
    %v79 = vld [vmem:[%s0 + $0x8] sm:$0x1]
    %v80 = vld [vmem:[%s0 + $0xa] sm:$0x1]
    %v81 = vld [vmem:[%s0 + $0xc] sm:$0x1]
    %v82 = vld [vmem:[%s0 + $0xe] sm:$0x1]
    %v83 = vld [vmem:[%s0 + $0x1] sm:$0x1]
    %v84 = vld [vmem:[%s0 + $0x3] sm:$0x1]
    %v85 = vld [vmem:[%s0 + $0x5] sm:$0x1]
    %v86 = vld [vmem:[%s0 + $0x7] sm:$0x1]
    %v87 = vld [vmem:[%s0 + $0x9] sm:$0x1]
    %v88 = vld [vmem:[%s0 + $0xb] sm:$0x1]
    %v89 = vld [vmem:[%s0 + $0xd] sm:$0x1]
    %v90 = vld [vmem:[%s0 + $0xf] sm:$0x1]
    %v99 = vrot.slane %v76, 7
    %vm100 = vcmask 1041409
    %v101 = vsel %vm100, %v99, %v75
    %v102 = vrot.slane %v77, 6
    %vm103 = vcmask 1042434
    %v104 = vsel %vm103, %v102, %v101
    %v105 = vrot.slane %v78, 5
    %vm106 = vcmask 1043459
    %v107 = vsel %vm106, %v105, %v104
    %v108 = vrot.slane %v79, 4
    %vm109 = vcmask 1044484
    %v110 = vsel %vm109, %v108, %v107
    %v111 = vrot.slane %v80, 3
    %vm112 = vcmask 1045509
    %v113 = vsel %vm112, %v111, %v110
    %v114 = vrot.slane %v81, 2
    %vm115 = vcmask 1046534
    %v116 = vsel %vm115, %v114, %v113
    %v117 = vrot.slane %v82, 1
    %vm118 = vcmask 1047559
    %v119 = vsel %vm118, %v117, %v116
    %v129 = vrot.slane %v84, 7
    %v130 = vsel %vm100, %v129, %v83
    %v131 = vrot.slane %v85, 6
    %v132 = vsel %vm103, %v131, %v130
    %v133 = vrot.slane %v86, 5
    %v134 = vsel %vm106, %v133, %v132
    %v135 = vrot.slane %v87, 4
    %v136 = vsel %vm109, %v135, %v134
    %v137 = vrot.slane %v88, 3
    %v138 = vsel %vm112, %v137, %v136
    %v139 = vrot.slane %v89, 2
    %v140 = vsel %vm115, %v139, %v138
    %v141 = vrot.slane %v90, 1
    %v142 = vsel %vm118, %v141, %v140
    %v144 = vpack.c.bf16 %v142, %v119
    %v145 = vld [vmem:[%s2] sm:$0xf]
    %v146 = vld [vmem:[%s2 + $0x4] sm:$0xf]
    %v147 = vld [vmem:[%s2 + $0x8] sm:$0xf]
    %v148 = vld [vmem:[%s2 + $0xc] sm:$0xf]
    %v149 = vlaneseq
    %v150 = vshrl.u32 %v149, 7
    %v151 = vsub.s32 0, %v150
    %v152 = vrot.slane %v67, %v151
    %v157 = vunpack.c.l.b16 %v145
    %v158 = vunpack.c.l.b16 %v146
    %v159 = vunpack.c.l.b16 %v147
    %v160 = vunpack.c.l.b16 %v148
    %v161 = vpack.c.b16 %v158, %v157
    %v162 = vpack.c.b16 %v160, %v159
    %vm165 = vcmask 261120
    %v167 = vsel %vm165, %v144, 0
    %169 = vmatprep.subr.bf16.mxu0 0
    %170 = vmatpush1.bf16.msra.mxu0 %v161
    %171 = vmatprep.subr.bf16.mxu0 0
    %172 = vmatpush1.bf16.msra.mxu0 %v162
    %173 = vmatprep.subr.bf16.mxu0 0
    %174 = vmatpush1.bf16.msra.mxu0 0
    %175 = vmatprep.subr.bf16.mxu0 0
    %176 = vmatpush1.bf16.msra.mxu0 0
    %177 = vmatprep.subr.bf16.mxu0 0
    %178 = vmatpush1.bf16.msra.mxu0 0
    %179 = vmatprep.subr.bf16.mxu0 0
    %180 = vmatpush1.bf16.msra.mxu0 0
    %181 = vmatprep.subr.bf16.mxu0 0
    %182 = vmatpush1.bf16.msra.mxu0 0
    %183 = vmatprep.subr.bf16.mxu0 0
    %184 = vmatpush1.bf16.msra.mxu0 0
    %185 = vmatprep.subr.bf16.mxu0 0
    %186 = vmatpush1.bf16.msra.mxu0 0
    %187 = vmatprep.subr.bf16.mxu0 0
    %188 = vmatpush1.bf16.msra.mxu0 0
    %189 = vmatprep.subr.bf16.mxu0 0
    %190 = vmatpush1.bf16.msra.mxu0 0
    %191 = vmatprep.subr.bf16.mxu0 0
    %192 = vmatpush1.bf16.msra.mxu0 0
    %193 = vmatprep.subr.bf16.mxu0 0
    %194 = vmatpush1.bf16.msra.mxu0 0
    %195 = vmatprep.subr.bf16.mxu0 0
    %196 = vmatpush1.bf16.msra.mxu0 0
    %197 = vmatprep.subr.bf16.mxu0 0
    %198 = vmatpush1.bf16.msra.mxu0 0
    %199 = vmatprep.subr.bf16.mxu0 0
    %200 = vmatpush1.bf16.msra.mxu0 0
    %201 = vmatprep.mubr.bf16.mxu0 0
    %202 = vmatmul.mubr.bf16.gmra.mrb[0].mxu0 %v167
    %v203 = vpop.f32.mrb[0].mxu0
    %v204 = vadd.f32 %v152, %v203
    %v205 = vpop.f32.mrb[0].mxu0
    %v206 = vpop.f32.mrb[0].mxu0
    %v207 = vadd.f32 %v152, %v206
    %v208 = vpop.f32.mrb[0].mxu0
    %209 = vdwg.mxu0
    %v210 = vpack.c.bf16 %v207, %v204
    %v211 = vlaneseq
    %v212 = vand.u32 %v211, 127
    %s213 = sld [smem:[#allocation2]]
    %v214 = vstv %s213
    %vm215 = vcmp.lt.s32.totalorder %v212, %v214
    %v216 = vsel %vm215, 0.0, -1e+30
    %s217 = sld [smem:[#allocation2 + $0x1]]
    %v218 = vstv %s217
    %vm219 = vcmp.lt.s32.totalorder %v212, %v218
    %v220 = vsel %vm219, 0.0, -1e+30
    %vm221 = vcmask 1040384
    %v222 = vsel %vm221, %v216, %v220
    %v224 = vunpack.c.l.b16 %v210
    %v225 = vunpack.c.h.b16 %v210
    %v226 = vpack.c.b16 %v224, %v224
    %v227 = vpack.c.b16 %v225, %v225
    %228 = vrot.lane.b32.xlu0 %v226, 120
    %v229 = vpop.permute.xlu0 %228
    %230 = vrot.lane.b32.xlu0 %v227, 120
    %v231 = vpop.permute.xlu0 %230
    %232 = vrot.lane.b32.xlu0 %v226, 112
    %v233 = vpop.permute.xlu0 %232
    %234 = vrot.lane.b32.xlu0 %v227, 112
    %v235 = vpop.permute.xlu0 %234
    %236 = vrot.lane.b32.xlu0 %v226, 104
    %v237 = vpop.permute.xlu0 %236
    %238 = vrot.lane.b32.xlu0 %v227, 104
    %v239 = vpop.permute.xlu0 %238
    %240 = vrot.lane.b32.xlu0 %v226, 96
    %v241 = vpop.permute.xlu0 %240
    %vm242 = vcmask 64512
    %v244 = vsel %vm242, %v226, 0
    %v247 = vsel %vm242, %v241, 0
    %249 = vmatprep.subr.bf16.mxu0 0
    %250 = vmatpush1.bf16.xpose.msra.mxu0 %v247
    %251 = vmatprep.subr.bf16.mxu0 0
    %252 = vmatpush1.bf16.xpose.msra.mxu0 0
    %253 = vmatprep.subr.bf16.mxu0 0
    %254 = vmatpush1.bf16.xpose.msra.mxu0 0
    %255 = vmatprep.subr.bf16.mxu0 0
    %256 = vmatpush1.bf16.xpose.msra.mxu0 0
    %257 = vmatprep.subr.bf16.mxu0 0
    %258 = vmatpush1.bf16.xpose.msra.mxu0 0
    %259 = vmatprep.subr.bf16.mxu0 0
    %260 = vmatpush1.bf16.xpose.msra.mxu0 0
    %261 = vmatprep.subr.bf16.mxu0 0
    %262 = vmatpush1.bf16.xpose.msra.mxu0 0
    %263 = vmatprep.subr.bf16.mxu0 0
    %264 = vmatpush1.bf16.xpose.msra.mxu0 0
    %265 = vmatprep.subr.bf16.mxu0 0
    %266 = vmatpush1.bf16.xpose.msra.mxu0 0
    %267 = vmatprep.subr.bf16.mxu0 0
    %268 = vmatpush1.bf16.xpose.msra.mxu0 0
    %269 = vmatprep.subr.bf16.mxu0 0
    %270 = vmatpush1.bf16.xpose.msra.mxu0 0
    %271 = vmatprep.subr.bf16.mxu0 0
    %272 = vmatpush1.bf16.xpose.msra.mxu0 0
    %273 = vmatprep.subr.bf16.mxu0 0
    %274 = vmatpush1.bf16.xpose.msra.mxu0 0
    %275 = vmatprep.subr.bf16.mxu0 0
    %276 = vmatpush1.bf16.xpose.msra.mxu0 0
    %277 = vmatprep.subr.bf16.mxu0 0
    %278 = vmatpush1.bf16.xpose.msra.mxu0 0
    %279 = vmatprep.subr.bf16.mxu0 0
    %280 = vmatpush1.bf16.xpose.msra.mxu0 0
    %281 = vmatprep.mubr.bf16.mxu0 0
    %282 = vmatmul.mubr.bf16.gmra.mrb[0].mxu0 %v244
    %v283 = vpop.f32.mrb[0].mxu0
    %v284 = vadd.f32 0.0, %v283
    %v285 = vpop.f32.mrb[0].mxu0
    %v286 = vpop.f32.mrb[0].mxu0
    %v287 = vpop.f32.mrb[0].mxu0
    %288 = vdwg.mxu0
    %289 = vrot.lane.b32.xlu0 %v227, 96
    %v290 = vpop.permute.xlu0 %289
    %v292 = vsel %vm242, %v227, 0
    %v295 = vsel %vm242, %v290, 0
    %297 = vmatprep.subr.bf16.mxu0 0
    %298 = vmatpush1.bf16.xpose.msra.mxu0 %v295
    %299 = vmatprep.subr.bf16.mxu0 0
    %300 = vmatpush1.bf16.xpose.msra.mxu0 0
    %301 = vmatprep.subr.bf16.mxu0 0
    %302 = vmatpush1.bf16.xpose.msra.mxu0 0
    %303 = vmatprep.subr.bf16.mxu0 0
    %304 = vmatpush1.bf16.xpose.msra.mxu0 0
    %305 = vmatprep.subr.bf16.mxu0 0
    %306 = vmatpush1.bf16.xpose.msra.mxu0 0
    %307 = vmatprep.subr.bf16.mxu0 0
    %308 = vmatpush1.bf16.xpose.msra.mxu0 0
    %309 = vmatprep.subr.bf16.mxu0 0
    %310 = vmatpush1.bf16.xpose.msra.mxu0 0
    %311 = vmatprep.subr.bf16.mxu0 0
    %312 = vmatpush1.bf16.xpose.msra.mxu0 0
    %313 = vmatprep.subr.bf16.mxu0 0
    %314 = vmatpush1.bf16.xpose.msra.mxu0 0
    %315 = vmatprep.subr.bf16.mxu0 0
    %316 = vmatpush1.bf16.xpose.msra.mxu0 0
    %317 = vmatprep.subr.bf16.mxu0 0
    %318 = vmatpush1.bf16.xpose.msra.mxu0 0
    %319 = vmatprep.subr.bf16.mxu0 0
    %320 = vmatpush1.bf16.xpose.msra.mxu0 0
    %321 = vmatprep.subr.bf16.mxu0 0
    %322 = vmatpush1.bf16.xpose.msra.mxu0 0
    %323 = vmatprep.subr.bf16.mxu0 0
    %324 = vmatpush1.bf16.xpose.msra.mxu0 0
    %325 = vmatprep.subr.bf16.mxu0 0
    %326 = vmatpush1.bf16.xpose.msra.mxu0 0
    %327 = vmatprep.subr.bf16.mxu0 0
    %328 = vmatpush1.bf16.xpose.msra.mxu0 0
    %329 = vmatprep.mubr.bf16.mxu0 0
    %330 = vmatmul.mubr.bf16.gmra.mrb[0].mxu0 %v292
    %v331 = vpop.f32.mrb[0].mxu0
    %v332 = vadd.f32 0.0, %v331
    %v333 = vpop.f32.mrb[0].mxu0
    %v334 = vpop.f32.mrb[0].mxu0
    %v335 = vpop.f32.mrb[0].mxu0
    %336 = vdwg.mxu0
    %v337 = vunpack.c.l.b16 %v229
    %v338 = vpack.c.b16 %v337, %v337
    %339 = vrot.lane.b32.xlu0 %v338, 96
    %v340 = vpop.permute.xlu0 %339
    %v342 = vsel %vm242, %v229, 0
    %v345 = vsel %vm242, %v340, 0
    %347 = vmatprep.subr.bf16.mxu0 0
    %348 = vmatpush1.bf16.xpose.msra.mxu0 %v345
    %349 = vmatprep.subr.bf16.mxu0 0
    %350 = vmatpush1.bf16.xpose.msra.mxu0 0
    %351 = vmatprep.subr.bf16.mxu0 0
    %352 = vmatpush1.bf16.xpose.msra.mxu0 0
    %353 = vmatprep.subr.bf16.mxu0 0
    %354 = vmatpush1.bf16.xpose.msra.mxu0 0
    %355 = vmatprep.subr.bf16.mxu0 0
    %356 = vmatpush1.bf16.xpose.msra.mxu0 0
    %357 = vmatprep.subr.bf16.mxu0 0
    %358 = vmatpush1.bf16.xpose.msra.mxu0 0
    %359 = vmatprep.subr.bf16.mxu0 0
    %360 = vmatpush1.bf16.xpose.msra.mxu0 0
    %361 = vmatprep.subr.bf16.mxu0 0
    %362 = vmatpush1.bf16.xpose.msra.mxu0 0
    %363 = vmatprep.subr.bf16.mxu0 0
    %364 = vmatpush1.bf16.xpose.msra.mxu0 0
    %365 = vmatprep.subr.bf16.mxu0 0
    %366 = vmatpush1.bf16.xpose.msra.mxu0 0
    %367 = vmatprep.subr.bf16.mxu0 0
    %368 = vmatpush1.bf16.xpose.msra.mxu0 0
    %369 = vmatprep.subr.bf16.mxu0 0
    %370 = vmatpush1.bf16.xpose.msra.mxu0 0
    %371 = vmatprep.subr.bf16.mxu0 0
    %372 = vmatpush1.bf16.xpose.msra.mxu0 0
    %373 = vmatprep.subr.bf16.mxu0 0
    %374 = vmatpush1.bf16.xpose.msra.mxu0 0
    %375 = vmatprep.subr.bf16.mxu0 0
    %376 = vmatpush1.bf16.xpose.msra.mxu0 0
    %377 = vmatprep.subr.bf16.mxu0 0
    %378 = vmatpush1.bf16.xpose.msra.mxu0 0
    %379 = vmatprep.mubr.bf16.mxu0 0
    %380 = vmatmul.mubr.bf16.gmra.mrb[0].mxu0 %v342
    %v381 = vpop.f32.mrb[0].mxu0
    %v382 = vadd.f32 0.0, %v381
    %v383 = vpop.f32.mrb[0].mxu0
    %v384 = vpop.f32.mrb[0].mxu0
    %v385 = vpop.f32.mrb[0].mxu0
    %386 = vdwg.mxu0
    %v387 = vunpack.c.l.b16 %v231
    %v388 = vpack.c.b16 %v387, %v387
    %389 = vrot.lane.b32.xlu0 %v388, 96
    %v390 = vpop.permute.xlu0 %389
    %v392 = vsel %vm242, %v231, 0
    %v395 = vsel %vm242, %v390, 0
    %397 = vmatprep.subr.bf16.mxu0 0
    %398 = vmatpush1.bf16.xpose.msra.mxu0 %v395
    %399 = vmatprep.subr.bf16.mxu0 0
    %400 = vmatpush1.bf16.xpose.msra.mxu0 0
    %401 = vmatprep.subr.bf16.mxu0 0
    %402 = vmatpush1.bf16.xpose.msra.mxu0 0
    %403 = vmatprep.subr.bf16.mxu0 0
    %404 = vmatpush1.bf16.xpose.msra.mxu0 0
    %405 = vmatprep.subr.bf16.mxu0 0
    %406 = vmatpush1.bf16.xpose.msra.mxu0 0
    %407 = vmatprep.subr.bf16.mxu0 0
    %408 = vmatpush1.bf16.xpose.msra.mxu0 0
    %409 = vmatprep.subr.bf16.mxu0 0
    %410 = vmatpush1.bf16.xpose.msra.mxu0 0
    %411 = vmatprep.subr.bf16.mxu0 0
    %412 = vmatpush1.bf16.xpose.msra.mxu0 0
    %413 = vmatprep.subr.bf16.mxu0 0
    %414 = vmatpush1.bf16.xpose.msra.mxu0 0
    %415 = vmatprep.subr.bf16.mxu0 0
    %416 = vmatpush1.bf16.xpose.msra.mxu0 0
    %417 = vmatprep.subr.bf16.mxu0 0
    %418 = vmatpush1.bf16.xpose.msra.mxu0 0
    %419 = vmatprep.subr.bf16.mxu0 0
    %420 = vmatpush1.bf16.xpose.msra.mxu0 0
    %421 = vmatprep.subr.bf16.mxu0 0
    %422 = vmatpush1.bf16.xpose.msra.mxu0 0
    %423 = vmatprep.subr.bf16.mxu0 0
    %424 = vmatpush1.bf16.xpose.msra.mxu0 0
    %425 = vmatprep.subr.bf16.mxu0 0
    %426 = vmatpush1.bf16.xpose.msra.mxu0 0
    %427 = vmatprep.subr.bf16.mxu0 0
    %428 = vmatpush1.bf16.xpose.msra.mxu0 0
    %429 = vmatprep.mubr.bf16.mxu0 0
    %430 = vmatmul.mubr.bf16.gmra.mrb[0].mxu0 %v392
    %v431 = vpop.f32.mrb[0].mxu0
    %v432 = vadd.f32 0.0, %v431
    %v433 = vpop.f32.mrb[0].mxu0
    %v434 = vpop.f32.mrb[0].mxu0
    %v435 = vpop.f32.mrb[0].mxu0
    %436 = vdwg.mxu0
    %v437 = vunpack.c.l.b16 %v233
    %v438 = vpack.c.b16 %v437, %v437
    %439 = vrot.lane.b32.xlu0 %v438, 96
    %v440 = vpop.permute.xlu0 %439
    %v442 = vsel %vm242, %v233, 0
    %v445 = vsel %vm242, %v440, 0
    %447 = vmatprep.subr.bf16.mxu0 0
    %448 = vmatpush1.bf16.xpose.msra.mxu0 %v445
    %449 = vmatprep.subr.bf16.mxu0 0
    %450 = vmatpush1.bf16.xpose.msra.mxu0 0
    %451 = vmatprep.subr.bf16.mxu0 0
    %452 = vmatpush1.bf16.xpose.msra.mxu0 0
    %453 = vmatprep.subr.bf16.mxu0 0
    %454 = vmatpush1.bf16.xpose.msra.mxu0 0
    %455 = vmatprep.subr.bf16.mxu0 0
    %456 = vmatpush1.bf16.xpose.msra.mxu0 0
    %457 = vmatprep.subr.bf16.mxu0 0
    %458 = vmatpush1.bf16.xpose.msra.mxu0 0
    %459 = vmatprep.subr.bf16.mxu0 0
    %460 = vmatpush1.bf16.xpose.msra.mxu0 0
    %461 = vmatprep.subr.bf16.mxu0 0
    %462 = vmatpush1.bf16.xpose.msra.mxu0 0
    %463 = vmatprep.subr.bf16.mxu0 0
    %464 = vmatpush1.bf16.xpose.msra.mxu0 0
    %465 = vmatprep.subr.bf16.mxu0 0
    %466 = vmatpush1.bf16.xpose.msra.mxu0 0
    %467 = vmatprep.subr.bf16.mxu0 0
    %468 = vmatpush1.bf16.xpose.msra.mxu0 0
    %469 = vmatprep.subr.bf16.mxu0 0
    %470 = vmatpush1.bf16.xpose.msra.mxu0 0
    %471 = vmatprep.subr.bf16.mxu0 0
    %472 = vmatpush1.bf16.xpose.msra.mxu0 0
    %473 = vmatprep.subr.bf16.mxu0 0
    %474 = vmatpush1.bf16.xpose.msra.mxu0 0
    %475 = vmatprep.subr.bf16.mxu0 0
    %476 = vmatpush1.bf16.xpose.msra.mxu0 0
    %477 = vmatprep.subr.bf16.mxu0 0
    %478 = vmatpush1.bf16.xpose.msra.mxu0 0
    %479 = vmatprep.mubr.bf16.mxu0 0
    %480 = vmatmul.mubr.bf16.gmra.mrb[0].mxu0 %v442
    %v481 = vpop.f32.mrb[0].mxu0
    %v482 = vadd.f32 0.0, %v481
    %v483 = vpop.f32.mrb[0].mxu0
    %v484 = vpop.f32.mrb[0].mxu0
    %v485 = vpop.f32.mrb[0].mxu0
    %486 = vdwg.mxu0
    %v487 = vunpack.c.l.b16 %v235
    %v488 = vpack.c.b16 %v487, %v487
    %489 = vrot.lane.b32.xlu0 %v488, 96
    %v490 = vpop.permute.xlu0 %489
    %v492 = vsel %vm242, %v235, 0
    %v495 = vsel %vm242, %v490, 0
    %497 = vmatprep.subr.bf16.mxu0 0
    %498 = vmatpush1.bf16.xpose.msra.mxu0 %v495
    %499 = vmatprep.subr.bf16.mxu0 0
    %500 = vmatpush1.bf16.xpose.msra.mxu0 0
    %501 = vmatprep.subr.bf16.mxu0 0
    %502 = vmatpush1.bf16.xpose.msra.mxu0 0
    %503 = vmatprep.subr.bf16.mxu0 0
    %504 = vmatpush1.bf16.xpose.msra.mxu0 0
    %505 = vmatprep.subr.bf16.mxu0 0
    %506 = vmatpush1.bf16.xpose.msra.mxu0 0
    %507 = vmatprep.subr.bf16.mxu0 0
    %508 = vmatpush1.bf16.xpose.msra.mxu0 0
    %509 = vmatprep.subr.bf16.mxu0 0
    %510 = vmatpush1.bf16.xpose.msra.mxu0 0
    %511 = vmatprep.subr.bf16.mxu0 0
    %512 = vmatpush1.bf16.xpose.msra.mxu0 0
    %513 = vmatprep.subr.bf16.mxu0 0
    %514 = vmatpush1.bf16.xpose.msra.mxu0 0
    %515 = vmatprep.subr.bf16.mxu0 0
    %516 = vmatpush1.bf16.xpose.msra.mxu0 0
    %517 = vmatprep.subr.bf16.mxu0 0
    %518 = vmatpush1.bf16.xpose.msra.mxu0 0
    %519 = vmatprep.subr.bf16.mxu0 0
    %520 = vmatpush1.bf16.xpose.msra.mxu0 0
    %521 = vmatprep.subr.bf16.mxu0 0
    %522 = vmatpush1.bf16.xpose.msra.mxu0 0
    %523 = vmatprep.subr.bf16.mxu0 0
    %524 = vmatpush1.bf16.xpose.msra.mxu0 0
    %525 = vmatprep.subr.bf16.mxu0 0
    %526 = vmatpush1.bf16.xpose.msra.mxu0 0
    %527 = vmatprep.subr.bf16.mxu0 0
    %528 = vmatpush1.bf16.xpose.msra.mxu0 0
    %529 = vmatprep.mubr.bf16.mxu0 0
    %530 = vmatmul.mubr.bf16.gmra.mrb[0].mxu0 %v492
    %v531 = vpop.f32.mrb[0].mxu0
    %v532 = vadd.f32 0.0, %v531
    %v533 = vpop.f32.mrb[0].mxu0
    %v534 = vpop.f32.mrb[0].mxu0
    %v535 = vpop.f32.mrb[0].mxu0
    %536 = vdwg.mxu0
    %v537 = vunpack.c.l.b16 %v237
    %v538 = vpack.c.b16 %v537, %v537
    %539 = vrot.lane.b32.xlu0 %v538, 96
    %v540 = vpop.permute.xlu0 %539
    %v542 = vsel %vm242, %v237, 0
    %v545 = vsel %vm242, %v540, 0
    %547 = vmatprep.subr.bf16.mxu0 0
    %548 = vmatpush1.bf16.xpose.msra.mxu0 %v545
    %549 = vmatprep.subr.bf16.mxu0 0
    %550 = vmatpush1.bf16.xpose.msra.mxu0 0
    %551 = vmatprep.subr.bf16.mxu0 0
    %552 = vmatpush1.bf16.xpose.msra.mxu0 0
    %553 = vmatprep.subr.bf16.mxu0 0
    %554 = vmatpush1.bf16.xpose.msra.mxu0 0
    %555 = vmatprep.subr.bf16.mxu0 0
    %556 = vmatpush1.bf16.xpose.msra.mxu0 0
    %557 = vmatprep.subr.bf16.mxu0 0
    %558 = vmatpush1.bf16.xpose.msra.mxu0 0
    %559 = vmatprep.subr.bf16.mxu0 0
    %560 = vmatpush1.bf16.xpose.msra.mxu0 0
    %561 = vmatprep.subr.bf16.mxu0 0
    %562 = vmatpush1.bf16.xpose.msra.mxu0 0
    %563 = vmatprep.subr.bf16.mxu0 0
    %564 = vmatpush1.bf16.xpose.msra.mxu0 0
    %565 = vmatprep.subr.bf16.mxu0 0
    %566 = vmatpush1.bf16.xpose.msra.mxu0 0
    %567 = vmatprep.subr.bf16.mxu0 0
    %568 = vmatpush1.bf16.xpose.msra.mxu0 0
    %569 = vmatprep.subr.bf16.mxu0 0
    %570 = vmatpush1.bf16.xpose.msra.mxu0 0
    %571 = vmatprep.subr.bf16.mxu0 0
    %572 = vmatpush1.bf16.xpose.msra.mxu0 0
    %573 = vmatprep.subr.bf16.mxu0 0
    %574 = vmatpush1.bf16.xpose.msra.mxu0 0
    %575 = vmatprep.subr.bf16.mxu0 0
    %576 = vmatpush1.bf16.xpose.msra.mxu0 0
    %577 = vmatprep.subr.bf16.mxu0 0
    %578 = vmatpush1.bf16.xpose.msra.mxu0 0
    %579 = vmatprep.mubr.bf16.mxu0 0
    %580 = vmatmul.mubr.bf16.gmra.mrb[0].mxu0 %v542
    %v581 = vpop.f32.mrb[0].mxu0
    %v582 = vadd.f32 0.0, %v581
    %v583 = vpop.f32.mrb[0].mxu0
    %v584 = vpop.f32.mrb[0].mxu0
    %v585 = vpop.f32.mrb[0].mxu0
    %586 = vdwg.mxu0
    %v587 = vunpack.c.l.b16 %v239
    %v588 = vpack.c.b16 %v587, %v587
    %589 = vrot.lane.b32.xlu0 %v588, 96
    %v590 = vpop.permute.xlu0 %589
    %v592 = vsel %vm242, %v239, 0
    %v595 = vsel %vm242, %v590, 0
    %597 = vmatprep.subr.bf16.mxu0 0
    %598 = vmatpush1.bf16.xpose.msra.mxu0 %v595
    %599 = vmatprep.subr.bf16.mxu0 0
    %600 = vmatpush1.bf16.xpose.msra.mxu0 0
    %601 = vmatprep.subr.bf16.mxu0 0
    %602 = vmatpush1.bf16.xpose.msra.mxu0 0
    %603 = vmatprep.subr.bf16.mxu0 0
    %604 = vmatpush1.bf16.xpose.msra.mxu0 0
    %605 = vmatprep.subr.bf16.mxu0 0
    %606 = vmatpush1.bf16.xpose.msra.mxu0 0
    %607 = vmatprep.subr.bf16.mxu0 0
    %608 = vmatpush1.bf16.xpose.msra.mxu0 0
    %609 = vmatprep.subr.bf16.mxu0 0
    %610 = vmatpush1.bf16.xpose.msra.mxu0 0
    %611 = vmatprep.subr.bf16.mxu0 0
    %612 = vmatpush1.bf16.xpose.msra.mxu0 0
    %613 = vmatprep.subr.bf16.mxu0 0
    %614 = vmatpush1.bf16.xpose.msra.mxu0 0
    %615 = vmatprep.subr.bf16.mxu0 0
    %616 = vmatpush1.bf16.xpose.msra.mxu0 0
    %617 = vmatprep.subr.bf16.mxu0 0
    %618 = vmatpush1.bf16.xpose.msra.mxu0 0
    %619 = vmatprep.subr.bf16.mxu0 0
    %620 = vmatpush1.bf16.xpose.msra.mxu0 0
    %621 = vmatprep.subr.bf16.mxu0 0
    %622 = vmatpush1.bf16.xpose.msra.mxu0 0
    %623 = vmatprep.subr.bf16.mxu0 0
    %624 = vmatpush1.bf16.xpose.msra.mxu0 0
    %625 = vmatprep.subr.bf16.mxu0 0
    %626 = vmatpush1.bf16.xpose.msra.mxu0 0
    %627 = vmatprep.subr.bf16.mxu0 0
    %628 = vmatpush1.bf16.xpose.msra.mxu0 0
    %629 = vmatprep.mubr.bf16.mxu0 0
    %630 = vmatmul.mubr.bf16.gmra.mrb[0].mxu0 %v592
    %v631 = vpop.f32.mrb[0].mxu0
    %v632 = vadd.f32 0.0, %v631
    %v633 = vpop.f32.mrb[0].mxu0
    %v634 = vpop.f32.mrb[0].mxu0
    %v635 = vpop.f32.mrb[0].mxu0
    %636 = vdwg.mxu0
    %v637 = vmul.f32 %v284, 0.35355338
    %v638 = vmul.f32 %v332, 0.35355338
    %v639 = vmul.f32 %v382, 0.35355338
    %v640 = vmul.f32 %v432, 0.35355338
    %v641 = vmul.f32 %v482, 0.35355338
    %v642 = vmul.f32 %v532, 0.35355338
    %v643 = vmul.f32 %v582, 0.35355338
    %v644 = vmul.f32 %v632, 0.35355338
    %v647 = vunpack.c.l.s4 1966171168
    %v648 = vunpack.c.0.s8 %v647
    %v649 = vlaneseq
    %v650 = vshrl.u32 %v649, 7
    %v651 = vsub.s32 %v648, %v650
    %v652 = vrot.slane %v222, %v651
    %v653 = vcombine.high %v652, %v652
    %v655 = vunpack.c.l.s4 1966171168
    %v656 = vunpack.c.0.s8 %v655
    %v657 = vlaneseq
    %v658 = vshrl.u32 %v657, 7
    %v659 = vsub.s32 %v656, %v658
    %v660 = vrot.slane %v652, %v659
    %v662 = vunpack.c.l.s4 1966171168
    %v663 = vunpack.c.0.s8 %v662
    %v664 = vlaneseq
    %v665 = vshrl.u32 %v664, 7
    %v666 = vsub.s32 %v663, %v665
    %v667 = vrot.slane %v653, %v666
    %v668 = vlaneseq
    %v669 = vshrl.u32 %v668, 7
    %v670 = vsub.s32 0, %v669
    %v671 = vrot.slane %v660, %v670
    %v672 = vlaneseq
    %v673 = vshrl.u32 %v672, 7
    %v674 = vsub.s32 0, %v673
    %v675 = vrot.slane %v667, %v674
    %v678 = vadd.f32 %v637, %v671
    %v679 = vadd.f32 %v638, %v675
    %v680 = vadd.f32 %v639, %v671
    %v681 = vadd.f32 %v640, %v675
    %v682 = vadd.f32 %v641, %v671
    %v683 = vadd.f32 %v642, %v675
    %v684 = vadd.f32 %v643, %v671
    %v685 = vadd.f32 %v644, %v675
    %v686 = vsel %vm242, %v678, -inf
    %687 = vmax.xlane.f32.xlu0 %v686
    %v688 = vpop.xlane.xlu0 %687
    %v689 = vsel %vm242, %v679, -inf
    %690 = vmax.xlane.f32.xlu0 %v689
    %v691 = vpop.xlane.xlu0 %690
    %v692 = vsel %vm242, %v680, -inf
    %693 = vmax.xlane.f32.xlu0 %v692
    %v694 = vpop.xlane.xlu0 %693
    %v695 = vsel %vm242, %v681, -inf
    %696 = vmax.xlane.f32.xlu0 %v695
    %v697 = vpop.xlane.xlu0 %696
    %v698 = vsel %vm242, %v682, -inf
    %699 = vmax.xlane.f32.xlu0 %v698
    %v700 = vpop.xlane.xlu0 %699
    %v701 = vsel %vm242, %v683, -inf
    %702 = vmax.xlane.f32.xlu0 %v701
    %v703 = vpop.xlane.xlu0 %702
    %v704 = vsel %vm242, %v684, -inf
    %705 = vmax.xlane.f32.xlu0 %v704
    %v706 = vpop.xlane.xlu0 %705
    %v707 = vsel %vm242, %v685, -inf
    %708 = vmax.xlane.f32.xlu0 %v707
    %v709 = vpop.xlane.xlu0 %708
    %v710 = vsub.f32 %v678, %v688
    %v711 = vsub.f32 %v679, %v691
    %v712 = vsub.f32 %v680, %v694
    %v713 = vsub.f32 %v681, %v697
    %v714 = vsub.f32 %v682, %v700
    %v715 = vsub.f32 %v683, %v703
    %v716 = vsub.f32 %v684, %v706
    %v717 = vsub.f32 %v685, %v709
    %v718 = vmul.f32 %v710, 1.442695
    %v719 = vpow.pop %v718
    %v720 = vmul.f32 %v711, 1.442695
    %v721 = vpow.pop %v720
    %v722 = vmul.f32 %v712, 1.442695
    %v723 = vpow.pop %v722
    %v724 = vmul.f32 %v713, 1.442695
    %v725 = vpow.pop %v724
    %v726 = vmul.f32 %v714, 1.442695
    %v727 = vpow.pop %v726
    %v728 = vmul.f32 %v715, 1.442695
    %v729 = vpow.pop %v728
    %v730 = vmul.f32 %v716, 1.442695
    %v731 = vpow.pop %v730
    %v732 = vmul.f32 %v717, 1.442695
    %v733 = vpow.pop %v732
    %v734 = vsel %vm242, %v719, 0.0
    %735 = vadd.xlane.f32.xlu0 %v734
    %v736 = vpop.xlane.xlu0 %735
    %v737 = vsel %vm242, %v721, 0.0
    %738 = vadd.xlane.f32.xlu0 %v737
    %v739 = vpop.xlane.xlu0 %738
    %v740 = vsel %vm242, %v723, 0.0
    %741 = vadd.xlane.f32.xlu0 %v740
    %v742 = vpop.xlane.xlu0 %741
    %v743 = vsel %vm242, %v725, 0.0
    %744 = vadd.xlane.f32.xlu0 %v743
    %v745 = vpop.xlane.xlu0 %744
    %v746 = vsel %vm242, %v727, 0.0
    %747 = vadd.xlane.f32.xlu0 %v746
    %v748 = vpop.xlane.xlu0 %747
    %v749 = vsel %vm242, %v729, 0.0
    %750 = vadd.xlane.f32.xlu0 %v749
    %v751 = vpop.xlane.xlu0 %750
    %v752 = vsel %vm242, %v731, 0.0
    %753 = vadd.xlane.f32.xlu0 %v752
    %v754 = vpop.xlane.xlu0 %753
    %v755 = vsel %vm242, %v733, 0.0
    %756 = vadd.xlane.f32.xlu0 %v755
    %v757 = vpop.xlane.xlu0 %756
    %v758 = vrcp.pop %v736
    %v759 = vrcp.pop %v739
    %v760 = vrcp.pop %v742
    %v761 = vrcp.pop %v745
    %v762 = vrcp.pop %v748
    %v763 = vrcp.pop %v751
    %v764 = vrcp.pop %v754
    %v765 = vrcp.pop %v757
    %v766 = vmul.f32 %v719, %v758
    %v767 = vmul.f32 %v721, %v759
    %v768 = vmul.f32 %v723, %v760
    %v769 = vmul.f32 %v725, %v761
    %v770 = vmul.f32 %v727, %v762
    %v771 = vmul.f32 %v729, %v763
    %v772 = vmul.f32 %v731, %v764
    %v773 = vmul.f32 %v733, %v765
    %v774 = vpack.c.bf16 %v766, %v766
    %v775 = vpack.c.bf16 %v767, %v767
    %v776 = vpack.c.bf16 %v768, %v768
    %v777 = vpack.c.bf16 %v769, %v769
    %v778 = vpack.c.bf16 %v770, %v770
    %v779 = vpack.c.bf16 %v771, %v771
    %v780 = vpack.c.bf16 %v772, %v772
    %v781 = vpack.c.bf16 %v773, %v773
    %782 = vrot.lane.b32.xlu0 %v226, 64
    %v783 = vpop.permute.xlu0 %782
    %v785 = vsel %vm242, %v774, 0
    %vm787 = vcmask 1043456
    %v789 = vsel %vm787, %v783, 0
    %791 = vmatprep.subr.bf16.mxu0 0
    %792 = vmatpush1.bf16.msra.mxu0 %v789
    %793 = vmatprep.subr.bf16.mxu0 0
    %794 = vmatpush1.bf16.msra.mxu0 0
    %795 = vmatprep.subr.bf16.mxu0 0
    %796 = vmatpush1.bf16.msra.mxu0 0
    %797 = vmatprep.subr.bf16.mxu0 0
    %798 = vmatpush1.bf16.msra.mxu0 0
    %799 = vmatprep.subr.bf16.mxu0 0
    %800 = vmatpush1.bf16.msra.mxu0 0
    %801 = vmatprep.subr.bf16.mxu0 0
    %802 = vmatpush1.bf16.msra.mxu0 0
    %803 = vmatprep.subr.bf16.mxu0 0
    %804 = vmatpush1.bf16.msra.mxu0 0
    %805 = vmatprep.subr.bf16.mxu0 0
    %806 = vmatpush1.bf16.msra.mxu0 0
    %807 = vmatprep.subr.bf16.mxu0 0
    %808 = vmatpush1.bf16.msra.mxu0 0
    %809 = vmatprep.subr.bf16.mxu0 0
    %810 = vmatpush1.bf16.msra.mxu0 0
    %811 = vmatprep.subr.bf16.mxu0 0
    %812 = vmatpush1.bf16.msra.mxu0 0
    %813 = vmatprep.subr.bf16.mxu0 0
    %814 = vmatpush1.bf16.msra.mxu0 0
    %815 = vmatprep.subr.bf16.mxu0 0
    %816 = vmatpush1.bf16.msra.mxu0 0
    %817 = vmatprep.subr.bf16.mxu0 0
    %818 = vmatpush1.bf16.msra.mxu0 0
    %819 = vmatprep.subr.bf16.mxu0 0
    %820 = vmatpush1.bf16.msra.mxu0 0
    %821 = vmatprep.subr.bf16.mxu0 0
    %822 = vmatpush1.bf16.msra.mxu0 0
    %823 = vmatprep.mubr.bf16.mxu0 0
    %824 = vmatmul.mubr.bf16.gmra.mrb[0].mxu0 %v785
    %v825 = vpop.f32.mrb[0].mxu0
    %v826 = vadd.f32 0.0, %v825
    %v827 = vpop.f32.mrb[0].mxu0
    %v828 = vpop.f32.mrb[0].mxu0
    %v829 = vpop.f32.mrb[0].mxu0
    %830 = vdwg.mxu0
    %831 = vrot.lane.b32.xlu0 %v227, 64
    %v832 = vpop.permute.xlu0 %831
    %v834 = vsel %vm242, %v775, 0
    %v837 = vsel %vm787, %v832, 0
    %839 = vmatprep.subr.bf16.mxu0 0
    %840 = vmatpush1.bf16.msra.mxu0 %v837
    %841 = vmatprep.subr.bf16.mxu0 0
    %842 = vmatpush1.bf16.msra.mxu0 0
    %843 = vmatprep.subr.bf16.mxu0 0
    %844 = vmatpush1.bf16.msra.mxu0 0
    %845 = vmatprep.subr.bf16.mxu0 0
    %846 = vmatpush1.bf16.msra.mxu0 0
    %847 = vmatprep.subr.bf16.mxu0 0
    %848 = vmatpush1.bf16.msra.mxu0 0
    %849 = vmatprep.subr.bf16.mxu0 0
    %850 = vmatpush1.bf16.msra.mxu0 0
    %851 = vmatprep.subr.bf16.mxu0 0
    %852 = vmatpush1.bf16.msra.mxu0 0
    %853 = vmatprep.subr.bf16.mxu0 0
    %854 = vmatpush1.bf16.msra.mxu0 0
    %855 = vmatprep.subr.bf16.mxu0 0
    %856 = vmatpush1.bf16.msra.mxu0 0
    %857 = vmatprep.subr.bf16.mxu0 0
    %858 = vmatpush1.bf16.msra.mxu0 0
    %859 = vmatprep.subr.bf16.mxu0 0
    %860 = vmatpush1.bf16.msra.mxu0 0
    %861 = vmatprep.subr.bf16.mxu0 0
    %862 = vmatpush1.bf16.msra.mxu0 0
    %863 = vmatprep.subr.bf16.mxu0 0
    %864 = vmatpush1.bf16.msra.mxu0 0
    %865 = vmatprep.subr.bf16.mxu0 0
    %866 = vmatpush1.bf16.msra.mxu0 0
    %867 = vmatprep.subr.bf16.mxu0 0
    %868 = vmatpush1.bf16.msra.mxu0 0
    %869 = vmatprep.subr.bf16.mxu0 0
    %870 = vmatpush1.bf16.msra.mxu0 0
    %871 = vmatprep.mubr.bf16.mxu0 0
    %872 = vmatmul.mubr.bf16.gmra.mrb[0].mxu0 %v834
    %v873 = vpop.f32.mrb[0].mxu0
    %v874 = vadd.f32 0.0, %v873
    %v875 = vpop.f32.mrb[0].mxu0
    %v876 = vpop.f32.mrb[0].mxu0
    %v877 = vpop.f32.mrb[0].mxu0
    %878 = vdwg.mxu0
    %879 = vrot.lane.b32.xlu0 %v338, 64
    %v880 = vpop.permute.xlu0 %879
    %v882 = vsel %vm242, %v776, 0
    %v885 = vsel %vm787, %v880, 0
    %887 = vmatprep.subr.bf16.mxu0 0
    %888 = vmatpush1.bf16.msra.mxu0 %v885
    %889 = vmatprep.subr.bf16.mxu0 0
    %890 = vmatpush1.bf16.msra.mxu0 0
    %891 = vmatprep.subr.bf16.mxu0 0
    %892 = vmatpush1.bf16.msra.mxu0 0
    %893 = vmatprep.subr.bf16.mxu0 0
    %894 = vmatpush1.bf16.msra.mxu0 0
    %895 = vmatprep.subr.bf16.mxu0 0
    %896 = vmatpush1.bf16.msra.mxu0 0
    %897 = vmatprep.subr.bf16.mxu0 0
    %898 = vmatpush1.bf16.msra.mxu0 0
    %899 = vmatprep.subr.bf16.mxu0 0
    %900 = vmatpush1.bf16.msra.mxu0 0
    %901 = vmatprep.subr.bf16.mxu0 0
    %902 = vmatpush1.bf16.msra.mxu0 0
    %903 = vmatprep.subr.bf16.mxu0 0
    %904 = vmatpush1.bf16.msra.mxu0 0
    %905 = vmatprep.subr.bf16.mxu0 0
    %906 = vmatpush1.bf16.msra.mxu0 0
    %907 = vmatprep.subr.bf16.mxu0 0
    %908 = vmatpush1.bf16.msra.mxu0 0
    %909 = vmatprep.subr.bf16.mxu0 0
    %910 = vmatpush1.bf16.msra.mxu0 0
    %911 = vmatprep.subr.bf16.mxu0 0
    %912 = vmatpush1.bf16.msra.mxu0 0
    %913 = vmatprep.subr.bf16.mxu0 0
    %914 = vmatpush1.bf16.msra.mxu0 0
    %915 = vmatprep.subr.bf16.mxu0 0
    %916 = vmatpush1.bf16.msra.mxu0 0
    %917 = vmatprep.subr.bf16.mxu0 0
    %918 = vmatpush1.bf16.msra.mxu0 0
    %919 = vmatprep.mubr.bf16.mxu0 0
    %920 = vmatmul.mubr.bf16.gmra.mrb[0].mxu0 %v882
    %v921 = vpop.f32.mrb[0].mxu0
    %v922 = vadd.f32 0.0, %v921
    %v923 = vpop.f32.mrb[0].mxu0
    %v924 = vpop.f32.mrb[0].mxu0
    %v925 = vpop.f32.mrb[0].mxu0
    %926 = vdwg.mxu0
    %927 = vrot.lane.b32.xlu0 %v388, 64
    %v928 = vpop.permute.xlu0 %927
    %v930 = vsel %vm242, %v777, 0
    %v933 = vsel %vm787, %v928, 0
    %935 = vmatprep.subr.bf16.mxu0 0
    %936 = vmatpush1.bf16.msra.mxu0 %v933
    %937 = vmatprep.subr.bf16.mxu0 0
    %938 = vmatpush1.bf16.msra.mxu0 0
    %939 = vmatprep.subr.bf16.mxu0 0
    %940 = vmatpush1.bf16.msra.mxu0 0
    %941 = vmatprep.subr.bf16.mxu0 0
    %942 = vmatpush1.bf16.msra.mxu0 0
    %943 = vmatprep.subr.bf16.mxu0 0
    %944 = vmatpush1.bf16.msra.mxu0 0
    %945 = vmatprep.subr.bf16.mxu0 0
    %946 = vmatpush1.bf16.msra.mxu0 0
    %947 = vmatprep.subr.bf16.mxu0 0
    %948 = vmatpush1.bf16.msra.mxu0 0
    %949 = vmatprep.subr.bf16.mxu0 0
    %950 = vmatpush1.bf16.msra.mxu0 0
    %951 = vmatprep.subr.bf16.mxu0 0
    %952 = vmatpush1.bf16.msra.mxu0 0
    %953 = vmatprep.subr.bf16.mxu0 0
    %954 = vmatpush1.bf16.msra.mxu0 0
    %955 = vmatprep.subr.bf16.mxu0 0
    %956 = vmatpush1.bf16.msra.mxu0 0
    %957 = vmatprep.subr.bf16.mxu0 0
    %958 = vmatpush1.bf16.msra.mxu0 0
    %959 = vmatprep.subr.bf16.mxu0 0
    %960 = vmatpush1.bf16.msra.mxu0 0
    %961 = vmatprep.subr.bf16.mxu0 0
    %962 = vmatpush1.bf16.msra.mxu0 0
    %963 = vmatprep.subr.bf16.mxu0 0
    %964 = vmatpush1.bf16.msra.mxu0 0
    %965 = vmatprep.subr.bf16.mxu0 0
    %966 = vmatpush1.bf16.msra.mxu0 0
    %967 = vmatprep.mubr.bf16.mxu0 0
    %968 = vmatmul.mubr.bf16.gmra.mrb[0].mxu0 %v930
    %v969 = vpop.f32.mrb[0].mxu0
    %v970 = vadd.f32 0.0, %v969
    %v971 = vpop.f32.mrb[0].mxu0
    %v972 = vpop.f32.mrb[0].mxu0
    %v973 = vpop.f32.mrb[0].mxu0
    %974 = vdwg.mxu0
    %975 = vrot.lane.b32.xlu0 %v438, 64
    %v976 = vpop.permute.xlu0 %975
    %v978 = vsel %vm242, %v778, 0
    %v981 = vsel %vm787, %v976, 0
    %983 = vmatprep.subr.bf16.mxu0 0
    %984 = vmatpush1.bf16.msra.mxu0 %v981
    %985 = vmatprep.subr.bf16.mxu0 0
    %986 = vmatpush1.bf16.msra.mxu0 0
    %987 = vmatprep.subr.bf16.mxu0 0
    %988 = vmatpush1.bf16.msra.mxu0 0
    %989 = vmatprep.subr.bf16.mxu0 0
    %990 = vmatpush1.bf16.msra.mxu0 0
    %991 = vmatprep.subr.bf16.mxu0 0
    %992 = vmatpush1.bf16.msra.mxu0 0
    %993 = vmatprep.subr.bf16.mxu0 0
    %994 = vmatpush1.bf16.msra.mxu0 0
    %995 = vmatprep.subr.bf16.mxu0 0
    %996 = vmatpush1.bf16.msra.mxu0 0
    %997 = vmatprep.subr.bf16.mxu0 0
    %998 = vmatpush1.bf16.msra.mxu0 0
    %999 = vmatprep.subr.bf16.mxu0 0
    %1000 = vmatpush1.bf16.msra.mxu0 0
    %1001 = vmatprep.subr.bf16.mxu0 0
    %1002 = vmatpush1.bf16.msra.mxu0 0
    %1003 = vmatprep.subr.bf16.mxu0 0
    %1004 = vmatpush1.bf16.msra.mxu0 0
    %1005 = vmatprep.subr.bf16.mxu0 0
    %1006 = vmatpush1.bf16.msra.mxu0 0
    %1007 = vmatprep.subr.bf16.mxu0 0
    %1008 = vmatpush1.bf16.msra.mxu0 0
    %1009 = vmatprep.subr.bf16.mxu0 0
    %1010 = vmatpush1.bf16.msra.mxu0 0
    %1011 = vmatprep.subr.bf16.mxu0 0
    %1012 = vmatpush1.bf16.msra.mxu0 0
    %1013 = vmatprep.subr.bf16.mxu0 0
    %1014 = vmatpush1.bf16.msra.mxu0 0
    %1015 = vmatprep.mubr.bf16.mxu0 0
    %1016 = vmatmul.mubr.bf16.gmra.mrb[0].mxu0 %v978
    %v1017 = vpop.f32.mrb[0].mxu0
    %v1018 = vadd.f32 0.0, %v1017
    %v1019 = vpop.f32.mrb[0].mxu0
    %v1020 = vpop.f32.mrb[0].mxu0
    %v1021 = vpop.f32.mrb[0].mxu0
    %1022 = vdwg.mxu0
    %1023 = vrot.lane.b32.xlu0 %v488, 64
    %v1024 = vpop.permute.xlu0 %1023
    %v1026 = vsel %vm242, %v779, 0
    %v1029 = vsel %vm787, %v1024, 0
    %1031 = vmatprep.subr.bf16.mxu0 0
    %1032 = vmatpush1.bf16.msra.mxu0 %v1029
    %1033 = vmatprep.subr.bf16.mxu0 0
    %1034 = vmatpush1.bf16.msra.mxu0 0
    %1035 = vmatprep.subr.bf16.mxu0 0
    %1036 = vmatpush1.bf16.msra.mxu0 0
    %1037 = vmatprep.subr.bf16.mxu0 0
    %1038 = vmatpush1.bf16.msra.mxu0 0
    %1039 = vmatprep.subr.bf16.mxu0 0
    %1040 = vmatpush1.bf16.msra.mxu0 0
    %1041 = vmatprep.subr.bf16.mxu0 0
    %1042 = vmatpush1.bf16.msra.mxu0 0
    %1043 = vmatprep.subr.bf16.mxu0 0
    %1044 = vmatpush1.bf16.msra.mxu0 0
    %1045 = vmatprep.subr.bf16.mxu0 0
    %1046 = vmatpush1.bf16.msra.mxu0 0
    %1047 = vmatprep.subr.bf16.mxu0 0
    %1048 = vmatpush1.bf16.msra.mxu0 0
    %1049 = vmatprep.subr.bf16.mxu0 0
    %1050 = vmatpush1.bf16.msra.mxu0 0
    %1051 = vmatprep.subr.bf16.mxu0 0
    %1052 = vmatpush1.bf16.msra.mxu0 0
    %1053 = vmatprep.subr.bf16.mxu0 0
    %1054 = vmatpush1.bf16.msra.mxu0 0
    %1055 = vmatprep.subr.bf16.mxu0 0
    %1056 = vmatpush1.bf16.msra.mxu0 0
    %1057 = vmatprep.subr.bf16.mxu0 0
    %1058 = vmatpush1.bf16.msra.mxu0 0
    %1059 = vmatprep.subr.bf16.mxu0 0
    %1060 = vmatpush1.bf16.msra.mxu0 0
    %1061 = vmatprep.subr.bf16.mxu0 0
    %1062 = vmatpush1.bf16.msra.mxu0 0
    %1063 = vmatprep.mubr.bf16.mxu0 0
    %1064 = vmatmul.mubr.bf16.gmra.mrb[0].mxu0 %v1026
    %v1065 = vpop.f32.mrb[0].mxu0
    %v1066 = vadd.f32 0.0, %v1065
    %v1067 = vpop.f32.mrb[0].mxu0
    %v1068 = vpop.f32.mrb[0].mxu0
    %v1069 = vpop.f32.mrb[0].mxu0
    %1070 = vdwg.mxu0
    %1071 = vrot.lane.b32.xlu0 %v538, 64
    %v1072 = vpop.permute.xlu0 %1071
    %v1074 = vsel %vm242, %v780, 0
    %v1077 = vsel %vm787, %v1072, 0
    %1079 = vmatprep.subr.bf16.mxu0 0
    %1080 = vmatpush1.bf16.msra.mxu0 %v1077
    %1081 = vmatprep.subr.bf16.mxu0 0
    %1082 = vmatpush1.bf16.msra.mxu0 0
    %1083 = vmatprep.subr.bf16.mxu0 0
    %1084 = vmatpush1.bf16.msra.mxu0 0
    %1085 = vmatprep.subr.bf16.mxu0 0
    %1086 = vmatpush1.bf16.msra.mxu0 0
    %1087 = vmatprep.subr.bf16.mxu0 0
    %1088 = vmatpush1.bf16.msra.mxu0 0
    %1089 = vmatprep.subr.bf16.mxu0 0
    %1090 = vmatpush1.bf16.msra.mxu0 0
    %1091 = vmatprep.subr.bf16.mxu0 0
    %1092 = vmatpush1.bf16.msra.mxu0 0
    %1093 = vmatprep.subr.bf16.mxu0 0
    %1094 = vmatpush1.bf16.msra.mxu0 0
    %1095 = vmatprep.subr.bf16.mxu0 0
    %1096 = vmatpush1.bf16.msra.mxu0 0
    %1097 = vmatprep.subr.bf16.mxu0 0
    %1098 = vmatpush1.bf16.msra.mxu0 0
    %1099 = vmatprep.subr.bf16.mxu0 0
    %1100 = vmatpush1.bf16.msra.mxu0 0
    %1101 = vmatprep.subr.bf16.mxu0 0
    %1102 = vmatpush1.bf16.msra.mxu0 0
    %1103 = vmatprep.subr.bf16.mxu0 0
    %1104 = vmatpush1.bf16.msra.mxu0 0
    %1105 = vmatprep.subr.bf16.mxu0 0
    %1106 = vmatpush1.bf16.msra.mxu0 0
    %1107 = vmatprep.subr.bf16.mxu0 0
    %1108 = vmatpush1.bf16.msra.mxu0 0
    %1109 = vmatprep.subr.bf16.mxu0 0
    %1110 = vmatpush1.bf16.msra.mxu0 0
    %1111 = vmatprep.mubr.bf16.mxu0 0
    %1112 = vmatmul.mubr.bf16.gmra.mrb[0].mxu0 %v1074
    %v1113 = vpop.f32.mrb[0].mxu0
    %v1114 = vadd.f32 0.0, %v1113
    %v1115 = vpop.f32.mrb[0].mxu0
    %v1116 = vpop.f32.mrb[0].mxu0
    %v1117 = vpop.f32.mrb[0].mxu0
    %1118 = vdwg.mxu0
    %1119 = vrot.lane.b32.xlu0 %v588, 64
    %v1120 = vpop.permute.xlu0 %1119
    %v1122 = vsel %vm242, %v781, 0
    %v1125 = vsel %vm787, %v1120, 0
    %1127 = vmatprep.subr.bf16.mxu0 0
    %1128 = vmatpush1.bf16.msra.mxu0 %v1125
    %1129 = vmatprep.subr.bf16.mxu0 0
    %1130 = vmatpush1.bf16.msra.mxu0 0
    %1131 = vmatprep.subr.bf16.mxu0 0
    %1132 = vmatpush1.bf16.msra.mxu0 0
    %1133 = vmatprep.subr.bf16.mxu0 0
    %1134 = vmatpush1.bf16.msra.mxu0 0
    %1135 = vmatprep.subr.bf16.mxu0 0
    %1136 = vmatpush1.bf16.msra.mxu0 0
    %1137 = vmatprep.subr.bf16.mxu0 0
    %1138 = vmatpush1.bf16.msra.mxu0 0
    %1139 = vmatprep.subr.bf16.mxu0 0
    %1140 = vmatpush1.bf16.msra.mxu0 0
    %1141 = vmatprep.subr.bf16.mxu0 0
    %1142 = vmatpush1.bf16.msra.mxu0 0
    %1143 = vmatprep.subr.bf16.mxu0 0
    %1144 = vmatpush1.bf16.msra.mxu0 0
    %1145 = vmatprep.subr.bf16.mxu0 0
    %1146 = vmatpush1.bf16.msra.mxu0 0
    %1147 = vmatprep.subr.bf16.mxu0 0
    %1148 = vmatpush1.bf16.msra.mxu0 0
    %1149 = vmatprep.subr.bf16.mxu0 0
    %1150 = vmatpush1.bf16.msra.mxu0 0
    %1151 = vmatprep.subr.bf16.mxu0 0
    %1152 = vmatpush1.bf16.msra.mxu0 0
    %1153 = vmatprep.subr.bf16.mxu0 0
    %1154 = vmatpush1.bf16.msra.mxu0 0
    %1155 = vmatprep.subr.bf16.mxu0 0
    %1156 = vmatpush1.bf16.msra.mxu0 0
    %1157 = vmatprep.subr.bf16.mxu0 0
    %1158 = vmatpush1.bf16.msra.mxu0 0
    %1159 = vmatprep.mubr.bf16.mxu0 0
    %1160 = vmatmul.mubr.bf16.gmra.mrb[0].mxu0 %v1122
    %v1161 = vpop.f32.mrb[0].mxu0
    %v1162 = vadd.f32 0.0, %v1161
    %v1163 = vpop.f32.mrb[0].mxu0
    %v1164 = vpop.f32.mrb[0].mxu0
    %v1165 = vpop.f32.mrb[0].mxu0
    %1166 = vdwg.mxu0
    %1169 = vrot.lane.b32.xlu0 %v922, 8
    %v1170 = vpop.permute.xlu0 %1169
    %1171 = vrot.lane.b32.xlu0 %v970, 8
    %v1172 = vpop.permute.xlu0 %1171
    %1177 = vrot.lane.b32.xlu0 %v1018, 16
    %v1178 = vpop.permute.xlu0 %1177
    %1179 = vrot.lane.b32.xlu0 %v1066, 16
    %v1180 = vpop.permute.xlu0 %1179
    %1185 = vrot.lane.b32.xlu0 %v1114, 24
    %v1186 = vpop.permute.xlu0 %1185
    %1187 = vrot.lane.b32.xlu0 %v1162, 24
    %v1188 = vpop.permute.xlu0 %1187
    %v1191 = vsel %vm242, %v826, %v1170
    %v1192 = vsel %vm242, %v874, %v1172
    %vm1193 = vcmask 130048
    %v1194 = vsel %vm1193, %v1191, %v1178
    %v1195 = vsel %vm1193, %v1192, %v1180
    %vm1196 = vcmask 195584
    %v1197 = vsel %vm1196, %v1194, %v1186
    %v1198 = vsel %vm1196, %v1195, %v1188
    %v1199 = vpack.c.bf16 %v1198, %v1197
    %v1200 = vld [vmem:[%s3] sm:$0xf]
    %v1201 = vld [vmem:[%s3 + $0x4] sm:$0xf]
    %v1202 = vld [vmem:[%s3 + $0x8] sm:$0xf]
    %v1203 = vld [vmem:[%s3 + $0xc] sm:$0xf]
    %v1204 = vlaneseq
    %v1205 = vshrl.u32 %v1204, 7
    %v1206 = vsub.s32 0, %v1205
    %v1207 = vrot.slane %v68, %v1206
    %v1212 = vunpack.c.l.b16 %v1200
    %v1213 = vunpack.c.l.b16 %v1201
    %v1214 = vunpack.c.l.b16 %v1202
    %v1215 = vunpack.c.l.b16 %v1203
    %v1216 = vpack.c.b16 %v1213, %v1212
    %v1217 = vpack.c.b16 %v1215, %v1214
    %v1221 = vsel %vm165, %v1199, 0
    %1223 = vmatprep.subr.bf16.mxu0 0
    %1224 = vmatpush1.bf16.msra.mxu0 %v1216
    %1225 = vmatprep.subr.bf16.mxu0 0
    %1226 = vmatpush1.bf16.msra.mxu0 %v1217
    %1227 = vmatprep.subr.bf16.mxu0 0
    %1228 = vmatpush1.bf16.msra.mxu0 0
    %1229 = vmatprep.subr.bf16.mxu0 0
    %1230 = vmatpush1.bf16.msra.mxu0 0
    %1231 = vmatprep.subr.bf16.mxu0 0
    %1232 = vmatpush1.bf16.msra.mxu0 0
    %1233 = vmatprep.subr.bf16.mxu0 0
    %1234 = vmatpush1.bf16.msra.mxu0 0
    %1235 = vmatprep.subr.bf16.mxu0 0
    %1236 = vmatpush1.bf16.msra.mxu0 0
    %1237 = vmatprep.subr.bf16.mxu0 0
    %1238 = vmatpush1.bf16.msra.mxu0 0
    %1239 = vmatprep.subr.bf16.mxu0 0
    %1240 = vmatpush1.bf16.msra.mxu0 0
    %1241 = vmatprep.subr.bf16.mxu0 0
    %1242 = vmatpush1.bf16.msra.mxu0 0
    %1243 = vmatprep.subr.bf16.mxu0 0
    %1244 = vmatpush1.bf16.msra.mxu0 0
    %1245 = vmatprep.subr.bf16.mxu0 0
    %1246 = vmatpush1.bf16.msra.mxu0 0
    %1247 = vmatprep.subr.bf16.mxu0 0
    %1248 = vmatpush1.bf16.msra.mxu0 0
    %1249 = vmatprep.subr.bf16.mxu0 0
    %1250 = vmatpush1.bf16.msra.mxu0 0
    %1251 = vmatprep.subr.bf16.mxu0 0
    %1252 = vmatpush1.bf16.msra.mxu0 0
    %1253 = vmatprep.subr.bf16.mxu0 0
    %1254 = vmatpush1.bf16.msra.mxu0 0
    %1255 = vmatprep.mubr.bf16.mxu0 0
    %1256 = vmatmul.mubr.bf16.gmra.mrb[0].mxu0 %v1221
    %v1257 = vpop.f32.mrb[0].mxu0
    %v1258 = vadd.f32 %v1207, %v1257
    %v1259 = vpop.f32.mrb[0].mxu0
    %v1260 = vpop.f32.mrb[0].mxu0
    %v1261 = vadd.f32 %v1207, %v1260
    %v1262 = vpop.f32.mrb[0].mxu0
    %1263 = vdwg.mxu0
    %v1264 = vadd.f32 %v119, %v1258
    %v1265 = vadd.f32 %v142, %v1261
    %v1266 = vsel %vm165, %v1264, 0.0
    %1267 = vadd.xlane.f32.xlu0 %v1266
    %v1268 = vpop.xlane.xlu0 %1267
    %v1269 = vsel %vm165, %v1265, 0.0
    %1270 = vadd.xlane.f32.xlu0 %v1269
    %v1271 = vpop.xlane.xlu0 %1270
    %v1272 = vrcp.pop 32.0
    %v1273 = vmul.f32 %v1268, %v1272
    %v1274 = vmul.f32 %v1271, %v1272
    %v1275 = vsub.f32 %v1264, %v1273
    %v1276 = vsub.f32 %v1265, %v1274
    %v1277 = vmul.f32 %v1275, %v1275
    %v1278 = vmul.f32 %v1276, %v1276
    %v1279 = vsel %vm165, %v1277, 0.0
    %1280 = vadd.xlane.f32.xlu0 %v1279
    %v1281 = vpop.xlane.xlu0 %1280
    %v1282 = vsel %vm165, %v1278, 0.0
    %1283 = vadd.xlane.f32.xlu0 %v1282
    %v1284 = vpop.xlane.xlu0 %1283
    %v1285 = vmul.f32 %v1281, %v1272
    %v1286 = vmul.f32 %v1284, %v1272
    %v1287 = vadd.f32 %v1285, 1e-05
    %v1288 = vadd.f32 %v1286, 1e-05
    %v1289 = vrsqrt.pop %v1287
    %v1290 = vrsqrt.pop %v1288
    %v1291 = vmul.f32 %v1275, %v1289
    %v1292 = vmul.f32 %v1276, %v1290
    %v1293 = vlaneseq
    %v1294 = vshrl.u32 %v1293, 7
    %v1295 = vsub.s32 0, %v1294
    %v1296 = vrot.slane %v71, %v1295
    %v1297 = vmul.f32 %v1291, %v1296
    %v1298 = vmul.f32 %v1292, %v1296
    %v1299 = vlaneseq
    %v1300 = vshrl.u32 %v1299, 7
    %v1301 = vsub.s32 0, %v1300
    %v1302 = vrot.slane %v72, %v1301
    %v1303 = vadd.f32 %v1297, %v1302
    %v1304 = vadd.f32 %v1298, %v1302
    %v1305 = vpack.c.bf16 %v1304, %v1303
    %v1306 = vld [vmem:[#allocation6] sm:$0xf]
    %v1307 = vld [vmem:[#allocation6 + $0x4] sm:$0xf]
    %v1308 = vld [vmem:[#allocation6 + $0x8] sm:$0xf]
    %v1309 = vld [vmem:[#allocation6 + $0xc] sm:$0xf]
    %v1310 = vlaneseq
    %v1311 = vshrl.u32 %v1310, 7
    %v1312 = vsub.s32 0, %v1311
    %v1313 = vrot.slane %v69, %v1312
    %v1318 = vunpack.c.l.b16 %v1306
    %v1319 = vunpack.c.l.b16 %v1307
    %v1320 = vunpack.c.l.b16 %v1308
    %v1321 = vunpack.c.l.b16 %v1309
    %v1322 = vpack.c.b16 %v1319, %v1318
    %v1323 = vpack.c.b16 %v1321, %v1320
    %v1327 = vsel %vm165, %v1305, 0
    %1329 = vmatprep.subr.bf16.mxu0 0
    %1330 = vmatpush1.bf16.msra.mxu0 %v1322
    %1331 = vmatprep.subr.bf16.mxu0 0
    %1332 = vmatpush1.bf16.msra.mxu0 %v1323
    %1333 = vmatprep.subr.bf16.mxu0 0
    %1334 = vmatpush1.bf16.msra.mxu0 0
    %1335 = vmatprep.subr.bf16.mxu0 0
    %1336 = vmatpush1.bf16.msra.mxu0 0
    %1337 = vmatprep.subr.bf16.mxu0 0
    %1338 = vmatpush1.bf16.msra.mxu0 0
    %1339 = vmatprep.subr.bf16.mxu0 0
    %1340 = vmatpush1.bf16.msra.mxu0 0
    %1341 = vmatprep.subr.bf16.mxu0 0
    %1342 = vmatpush1.bf16.msra.mxu0 0
    %1343 = vmatprep.subr.bf16.mxu0 0
    %1344 = vmatpush1.bf16.msra.mxu0 0
    %1345 = vmatprep.subr.bf16.mxu0 0
    %1346 = vmatpush1.bf16.msra.mxu0 0
    %1347 = vmatprep.subr.bf16.mxu0 0
    %1348 = vmatpush1.bf16.msra.mxu0 0
    %1349 = vmatprep.subr.bf16.mxu0 0
    %1350 = vmatpush1.bf16.msra.mxu0 0
    %1351 = vmatprep.subr.bf16.mxu0 0
    %1352 = vmatpush1.bf16.msra.mxu0 0
    %1353 = vmatprep.subr.bf16.mxu0 0
    %1354 = vmatpush1.bf16.msra.mxu0 0
    %1355 = vmatprep.subr.bf16.mxu0 0
    %1356 = vmatpush1.bf16.msra.mxu0 0
    %1357 = vmatprep.subr.bf16.mxu0 0
    %1358 = vmatpush1.bf16.msra.mxu0 0
    %1359 = vmatprep.subr.bf16.mxu0 0
    %1360 = vmatpush1.bf16.msra.mxu0 0
    %1361 = vmatprep.mubr.bf16.mxu0 0
    %1362 = vmatmul.mubr.bf16.gmra.mrb[0].mxu0 %v1327
    %v1363 = vpop.f32.mrb[0].mxu0
    %v1364 = vadd.f32 %v1313, %v1363
    %v1365 = vpop.f32.mrb[0].mxu0
    %v1366 = vpop.f32.mrb[0].mxu0
    %v1367 = vadd.f32 %v1313, %v1366
    %v1368 = vpop.f32.mrb[0].mxu0
    %1369 = vdwg.mxu0
    %v1370 = vmax.f32 %v1364, 0.0
    %v1371 = vmax.f32 %v1367, 0.0
    %v1372 = vpack.c.bf16 %v1371, %v1370
    %v1373 = vld [vmem:[%s5] sm:$0xf]
    %v1374 = vld [vmem:[%s5 + $0x4] sm:$0xf]
    %v1375 = vld [vmem:[%s5 + $0x8] sm:$0xf]
    %v1376 = vld [vmem:[%s5 + $0xc] sm:$0xf]
    %v1377 = vld [vmem:[%s5 + $0x10] sm:$0xf]
    %v1378 = vld [vmem:[%s5 + $0x14] sm:$0xf]
    %v1379 = vlaneseq
    %v1380 = vshrl.u32 %v1379, 7
    %v1381 = vsub.s32 0, %v1380
    %v1382 = vrot.slane %v70, %v1381
    %v1389 = vunpack.c.l.b16 %v1373
    %v1390 = vunpack.c.l.b16 %v1374
    %v1391 = vunpack.c.l.b16 %v1375
    %v1392 = vunpack.c.l.b16 %v1376
    %v1393 = vunpack.c.l.b16 %v1377
    %v1394 = vunpack.c.l.b16 %v1378
    %v1395 = vpack.c.b16 %v1390, %v1389
    %v1396 = vpack.c.b16 %v1392, %v1391
    %v1397 = vpack.c.b16 %v1394, %v1393
    %vm1401 = vcmask 392192
    %v1403 = vsel %vm1401, %v1372, 0
    %1405 = vmatprep.subr.bf16.mxu0 0
    %1406 = vmatpush1.bf16.msra.mxu0 %v1395
    %1407 = vmatprep.subr.bf16.mxu0 0
    %1408 = vmatpush1.bf16.msra.mxu0 %v1396
    %1409 = vmatprep.subr.bf16.mxu0 0
    %1410 = vmatpush1.bf16.msra.mxu0 %v1397
    %1411 = vmatprep.subr.bf16.mxu0 0
    %1412 = vmatpush1.bf16.msra.mxu0 0
    %1413 = vmatprep.subr.bf16.mxu0 0
    %1414 = vmatpush1.bf16.msra.mxu0 0
    %1415 = vmatprep.subr.bf16.mxu0 0
    %1416 = vmatpush1.bf16.msra.mxu0 0
    %1417 = vmatprep.subr.bf16.mxu0 0
    %1418 = vmatpush1.bf16.msra.mxu0 0
    %1419 = vmatprep.subr.bf16.mxu0 0
    %1420 = vmatpush1.bf16.msra.mxu0 0
    %1421 = vmatprep.subr.bf16.mxu0 0
    %1422 = vmatpush1.bf16.msra.mxu0 0
    %1423 = vmatprep.subr.bf16.mxu0 0
    %1424 = vmatpush1.bf16.msra.mxu0 0
    %1425 = vmatprep.subr.bf16.mxu0 0
    %1426 = vmatpush1.bf16.msra.mxu0 0
    %1427 = vmatprep.subr.bf16.mxu0 0
    %1428 = vmatpush1.bf16.msra.mxu0 0
    %1429 = vmatprep.subr.bf16.mxu0 0
    %1430 = vmatpush1.bf16.msra.mxu0 0
    %1431 = vmatprep.subr.bf16.mxu0 0
    %1432 = vmatpush1.bf16.msra.mxu0 0
    %1433 = vmatprep.subr.bf16.mxu0 0
    %1434 = vmatpush1.bf16.msra.mxu0 0
    %1435 = vmatprep.subr.bf16.mxu0 0
    %1436 = vmatpush1.bf16.msra.mxu0 0
    %1437 = vmatprep.mubr.bf16.mxu0 0
    %1438 = vmatmul.mubr.bf16.gmra.mrb[0].mxu0 %v1403
    %v1439 = vpop.f32.mrb[0].mxu0
    %v1440 = vadd.f32 %v1382, %v1439
    %v1441 = vpop.f32.mrb[0].mxu0
    %v1442 = vpop.f32.mrb[0].mxu0
    %v1443 = vadd.f32 %v1382, %v1442
    %v1444 = vpop.f32.mrb[0].mxu0
    %1445 = vdwg.mxu0
    %v1446 = vadd.f32 %v1303, %v1440
    %v1447 = vadd.f32 %v1304, %v1443
    %v1448 = vsel %vm165, %v1446, 0.0
    %1449 = vadd.xlane.f32.xlu0 %v1448
    %v1450 = vpop.xlane.xlu0 %1449
    %v1451 = vsel %vm165, %v1447, 0.0
    %1452 = vadd.xlane.f32.xlu0 %v1451
    %v1453 = vpop.xlane.xlu0 %1452
    %v1454 = vmul.f32 %v1450, %v1272
    %v1455 = vmul.f32 %v1453, %v1272
    %v1456 = vsub.f32 %v1446, %v1454
    %v1457 = vsub.f32 %v1447, %v1455
    %v1458 = vmul.f32 %v1456, %v1456
    %v1459 = vmul.f32 %v1457, %v1457
    %v1460 = vsel %vm165, %v1458, 0.0
    %1461 = vadd.xlane.f32.xlu0 %v1460
    %v1462 = vpop.xlane.xlu0 %1461
    %v1463 = vsel %vm165, %v1459, 0.0
    %1464 = vadd.xlane.f32.xlu0 %v1463
    %v1465 = vpop.xlane.xlu0 %1464
    %v1466 = vmul.f32 %v1462, %v1272
    %v1467 = vmul.f32 %v1465, %v1272
    %v1468 = vadd.f32 %v1466, 1e-05
    %v1469 = vadd.f32 %v1467, 1e-05
    %v1470 = vrsqrt.pop %v1468
    %v1471 = vrsqrt.pop %v1469
    %v1472 = vmul.f32 %v1456, %v1470
    %v1473 = vmul.f32 %v1457, %v1471
    %v1474 = vlaneseq
    %v1475 = vshrl.u32 %v1474, 7
    %v1476 = vsub.s32 0, %v1475
    %v1477 = vrot.slane %v73, %v1476
    %v1478 = vmul.f32 %v1472, %v1477
    %v1479 = vmul.f32 %v1473, %v1477
    %v1480 = vlaneseq
    %v1481 = vshrl.u32 %v1480, 7
    %v1482 = vsub.s32 0, %v1481
    %v1483 = vrot.slane %v74, %v1482
    %v1484 = vadd.f32 %v1478, %v1483
    %v1485 = vadd.f32 %v1479, %v1483
    %v1487 = vcombine.high %v1484, %v1484
    %v1489 = vunpack.c.l.s4 1966171168
    %v1490 = vunpack.c.0.s8 %v1489
    %v1491 = vlaneseq
    %v1492 = vshrl.u32 %v1491, 7
    %v1493 = vsub.s32 %v1490, %v1492
    %v1494 = vrot.slane %v1484, %v1493
    %v1496 = vunpack.c.l.s4 1966171168
    %v1497 = vunpack.c.0.s8 %v1496
    %v1498 = vlaneseq
    %v1499 = vshrl.u32 %v1498, 7
    %v1500 = vsub.s32 %v1497, %v1499
    %v1501 = vrot.slane %v1487, %v1500
    %v1502 = vcombine.high %v1494, %v1494
    %v1503 = vcombine.high %v1501, %v1501
    %v1505 = vunpack.c.l.s4 1966171168
    %v1506 = vunpack.c.0.s8 %v1505
    %v1507 = vlaneseq
    %v1508 = vshrl.u32 %v1507, 7
    %v1509 = vsub.s32 %v1506, %v1508
    %v1510 = vrot.slane %v1494, %v1509
    %v1512 = vunpack.c.l.s4 1966171168
    %v1513 = vunpack.c.0.s8 %v1512
    %v1514 = vlaneseq
    %v1515 = vshrl.u32 %v1514, 7
    %v1516 = vsub.s32 %v1513, %v1515
    %v1517 = vrot.slane %v1501, %v1516
    %v1519 = vunpack.c.l.s4 1966171168
    %v1520 = vunpack.c.0.s8 %v1519
    %v1521 = vlaneseq
    %v1522 = vshrl.u32 %v1521, 7
    %v1523 = vsub.s32 %v1520, %v1522
    %v1524 = vrot.slane %v1502, %v1523
    %v1526 = vunpack.c.l.s4 1966171168
    %v1527 = vunpack.c.0.s8 %v1526
    %v1528 = vlaneseq
    %v1529 = vshrl.u32 %v1528, 7
    %v1530 = vsub.s32 %v1527, %v1529
    %v1531 = vrot.slane %v1503, %v1530
    %v1532 = vcombine.high %v1510, %v1510
    %v1533 = vcombine.high %v1517, %v1517
    %v1534 = vcombine.high %v1524, %v1524
    %v1535 = vcombine.high %v1531, %v1531
    %vm1544 = vcmask 253952
    %1545 = vst.msk [vmem:[#allocation9] sm:$0x1] %vm1544, %v1510
    %1546 = vst.msk [vmem:[#allocation9 + $0x2] sm:$0x1] %vm1544, %v1524
    %1547 = vst.msk [vmem:[#allocation9 + $0x4] sm:$0x1] %vm1544, %v1532
    %1548 = vst.msk [vmem:[#allocation9 + $0x6] sm:$0x1] %vm1544, %v1534
    %1549 = vst.msk [vmem:[#allocation9 + $0x8] sm:$0x1] %vm1544, %v1517
    %1550 = vst.msk [vmem:[#allocation9 + $0xa] sm:$0x1] %vm1544, %v1531
    %1551 = vst.msk [vmem:[#allocation9 + $0xc] sm:$0x1] %vm1544, %v1533
    %1552 = vst.msk [vmem:[#allocation9 + $0xe] sm:$0x1] %vm1544, %v1535
    %v1554 = vcombine.high %v1485, %v1485
    %v1556 = vunpack.c.l.s4 1966171168
    %v1557 = vunpack.c.0.s8 %v1556
    %v1558 = vlaneseq
    %v1559 = vshrl.u32 %v1558, 7
    %v1560 = vsub.s32 %v1557, %v1559
    %v1561 = vrot.slane %v1485, %v1560
    %v1563 = vunpack.c.l.s4 1966171168
    %v1564 = vunpack.c.0.s8 %v1563
    %v1565 = vlaneseq
    %v1566 = vshrl.u32 %v1565, 7
    %v1567 = vsub.s32 %v1564, %v1566
    %v1568 = vrot.slane %v1554, %v1567
    %v1569 = vcombine.high %v1561, %v1561
    %v1570 = vcombine.high %v1568, %v1568
    %v1572 = vunpack.c.l.s4 1966171168
    %v1573 = vunpack.c.0.s8 %v1572
    %v1574 = vlaneseq
    %v1575 = vshrl.u32 %v1574, 7
    %v1576 = vsub.s32 %v1573, %v1575
    %v1577 = vrot.slane %v1561, %v1576
    %v1579 = vunpack.c.l.s4 1966171168
    %v1580 = vunpack.c.0.s8 %v1579
    %v1581 = vlaneseq
    %v1582 = vshrl.u32 %v1581, 7
    %v1583 = vsub.s32 %v1580, %v1582
    %v1584 = vrot.slane %v1568, %v1583
    %v1586 = vunpack.c.l.s4 1966171168
    %v1587 = vunpack.c.0.s8 %v1586
    %v1588 = vlaneseq
    %v1589 = vshrl.u32 %v1588, 7
    %v1590 = vsub.s32 %v1587, %v1589
    %v1591 = vrot.slane %v1569, %v1590
    %v1593 = vunpack.c.l.s4 1966171168
    %v1594 = vunpack.c.0.s8 %v1593
    %v1595 = vlaneseq
    %v1596 = vshrl.u32 %v1595, 7
    %v1597 = vsub.s32 %v1594, %v1596
    %v1598 = vrot.slane %v1570, %v1597
    %v1599 = vcombine.high %v1577, %v1577
    %v1600 = vcombine.high %v1584, %v1584
    %v1601 = vcombine.high %v1591, %v1591
    %v1602 = vcombine.high %v1598, %v1598
    %1611 = vst.msk [vmem:[#allocation9 + $0x1] sm:$0x1] %vm1544, %v1577
    %1612 = vst.msk [vmem:[#allocation9 + $0x3] sm:$0x1] %vm1544, %v1591
    %1613 = vst.msk [vmem:[#allocation9 + $0x5] sm:$0x1] %vm1544, %v1599
    %1614 = vst.msk [vmem:[#allocation9 + $0x7] sm:$0x1] %vm1544, %v1601
    %1615 = vst.msk [vmem:[#allocation9 + $0x9] sm:$0x1] %vm1544, %v1584
    %1616 = vst.msk [vmem:[#allocation9 + $0xb] sm:$0x1] %vm1544, %v1598
    %1617 = vst.msk [vmem:[#allocation9 + $0xd] sm:$0x1] %vm1544, %v1600
    %1618 = vst.msk [vmem:[#allocation9 + $0xf] sm:$0x1] %vm1544, %v1602
    // Predicated region
    $region42: #{self_attention_layer.1} parent=1 // pred_check
      _
    $region43: #{self_attention_layer.1} parent=1 // pred_check_branch
      %1620 = sbr.rel (0) target = $region45
    $region44: #{self_attention_layer.1} parent=1 // pred_region
      %s1622 = ssub.s32 256, 256
      %1623 = vsyncadd [#allocation4], %s1622
      %s1624 = sshll.u32 [#allocation9], 4
      %s1625 = int_to_ptr.vmem [resolvable:$true] %s1624
      %1630 = dma.vmem_to_hbm [thread:$0]  %s1625, 256, %s7, [#allocation4], 32, 32, 2
    $region45: #{self_attention_layer.1} parent=1 // pred_fallthru
      _
    // Predicated region
    $region46: #{self_attention_layer.1} parent=1 // pred_check
      _
    $region47: #{self_attention_layer.1} parent=1 // pred_check_branch
      %1632 = sbr.rel (0) target = $region49
    $region48: #{self_attention_layer.1} parent=1 // pred_region
      %1633 = dma.done [#allocation4], 256
    $region49: #{self_attention_layer.1} parent=1 // pred_fallthru
      _
    %1634 = vsyncpa [#allocation3], 1
    %1635 = vsyncpa [#allocation8], 1
    %1636 = vsyncpa [#allocation4], 1
    %1637 = vsyncpa [#allocation5], 1

</llo_original>
